<compile_context>
chip_gen: v7x
topology: tpu7x:2x2x1
jax: 0.10.0
libtpu: 0.0.40
codegen_flags: <defaults>
</compile_context>

<pallas_src>
import functools
import math

import jax
import jax.numpy as jnp
from jax import lax
from jax.experimental import pallas as pl
from jax.experimental.pallas import tpu as pltpu

LAYER_NORM_EPS = 1e-12  # FNet default config.layer_norm_eps


def _gelu_new(x):
    # HF ACT2FN["gelu_new"] (tanh approximation), FNet's default hidden_act.
    return 0.5 * x * (1.0 + jnp.tanh(
        math.sqrt(2.0 / math.pi) * (x + 0.044715 * x * x * x)))


def _layer_norm(x, gamma, beta):
    mu = jnp.mean(x, axis=-1, keepdims=True)
    var = jnp.mean((x - mu) * (x - mu), axis=-1, keepdims=True)
    return (x - mu) * lax.rsqrt(var + LAYER_NORM_EPS) * gamma + beta


def _fnet_encoder_kernel(x_ref, cs_ref, nss_ref, chsh_ref, pv_ref, bi_ref,
                         wi_ref, wo_ref, o_ref, *, bt, hidden, row_chunk):
    """Grid = (batch_block, layer).

    The output block (same batch-block index across the layer axis) stays
    resident in VMEM and carries the hidden state from one layer to the
    next; it is initialized from the input at layer 0.
    """
    layer = pl.program_id(1)

    @pl.when(layer == 0)
    def _():
        o_ref[...] = x_ref[...]

    pv = pv_ref[0]                      # (5, H) f32: ln1_g, ln1_b, ln2_g, ln2_b, bo
    ln1_g, ln1_b = pv[0:1, :], pv[1:2, :]
    ln2_g, ln2_b = pv[2:3, :], pv[3:4, :]
    bo = pv[4:5, :]                     # (1, H) f32
    bi = bi_ref[0]                      # (1, I) f32
    wi = wi_ref[0]                      # (H, I) bf16
    wo = wo_ref[0]                      # (I, H) bf16
    cs = cs_ref[...]                    # (S, S)  bf16  cos(seq DFT)
    nss = nss_ref[...]                  # (S, S)  bf16  -sin(seq DFT)
    chsh = chsh_ref[...]                # (H, 2H) bf16  [cos | sin](hidden DFT)

    for b in range(bt):                 # static, small batch block
        h = o_ref[b]                    # (S, H) f32 — current hidden state
        hb = h.astype(jnp.bfloat16)

        # --- Fourier mixing (all-bf16 MXU, f32 accumulation) -----------------
        # hidden-dim stage, one fused MXU call: [A | B] = h @ [Ch | Sh]
        ab = jnp.dot(hb, chsh, preferred_element_type=jnp.float32)   # (S, 2H)
        a_ = ab[:, :hidden].astype(jnp.bfloat16)
        b_ = ab[:, hidden:].astype(jnp.bfloat16)
        # seq-dim stage: Re(FFT2(h)) = Cs @ A - Ss @ B = Cs @ A + (-Ss) @ B
        f_real = (jnp.dot(cs, a_, preferred_element_type=jnp.float32)
                  + jnp.dot(nss, b_, preferred_element_type=jnp.float32))

        # --- residual + LayerNorm 1 (f32 statistics) -------------------------
        h1 = _layer_norm(h + f_real, ln1_g, ln1_b)      # (S, H) f32
        h1b = h1.astype(jnp.bfloat16)

        # --- feed-forward, chunked over rows to bound the (rows, I) live ----
        # intermediate; bf16 matmuls with f32 accumulation.
        seq_len = h1.shape[0]
        for r0 in range(0, seq_len, row_chunk):
            r1 = r0 + row_chunk
            inter = jnp.dot(h1b[r0:r1, :], wi,
                            preferred_element_type=jnp.float32) + bi
            inter = _gelu_new(inter).astype(jnp.bfloat16)   # straight to bf16
            ffn = jnp.dot(inter, wo,
                          preferred_element_type=jnp.float32) + bo
            # dropout(hidden_dropout_prob) is identity at inference time.
            h2 = _layer_norm(ffn + h1[r0:r1, :], ln2_g, ln2_b)
            o_ref[b, r0:r1, :] = h2.astype(o_ref.dtype)


def _dft_cos_sin(n):
    """cos/sin parts of the n-point DFT matrix D[j,k] = exp(-2*pi*i*j*k/n)."""
    k = jnp.arange(n, dtype=jnp.int32)
    kk = (k[:, None] * k[None, :]) % n            # exact modular reduction
    ang = (2.0 * jnp.pi / n) * kk.astype(jnp.float32)
    return jnp.cos(ang), jnp.sin(ang)


def _pick_row_chunk(seq, inter, target_bytes=2 << 20):
    """Largest row chunk (divisor of seq, multiple of 8) with a ~2 MiB f32
    (rows, inter) intermediate."""
    max_rows = max(8, target_bytes // (4 * inter))
    if seq <= max_rows:
        return seq
    r = (max_rows // 8) * 8
    while r >= 8:
        if seq % r == 0:
            return r
        r -= 8
    return seq


def _pick_vmem_limit_bytes():
    """Per-generation VMEM budget: ~7/8 of physical, capped at 112 MiB
    (so v7x' 64 MiB chip gets ~56 MiB, v5e/v6e get 112 MiB)."""
    cap = None
    try:
        cap = getattr(pltpu.get_tpu_info(), "vmem_capacity_bytes", None)
    except Exception:
        cap = None
    if not cap:
        cap = 64 * 1024 * 1024          # conservative fallback (v7x physical)
    return int(min(cap - cap // 8, 112 * 1024 * 1024))


def _maybe_single_buffered(block_shape, index_map, single_buffer):
    """Grid-invariant operands only need one pipeline buffer."""
    if single_buffer:
        try:
            return pl.BlockSpec(block_shape, index_map,
                                pipeline_mode=pl.Buffered(1))
        except Exception:
            pass
    return pl.BlockSpec(block_shape, index_map)


def fnet_encoder(hidden_states, params, *, batch_block=None,
                 single_buffer_invariants=True):
    """hidden_states: (B, S, H) float32. Returns last_hidden_state (B, S, H)."""
    B, S, H = hidden_states.shape
    L, _, I = params["wi"].shape

    if batch_block is None:
        batch_block = 2 if B % 2 == 0 else 1
    bt = batch_block
    assert B % bt == 0, "batch_block must divide batch"
    nb = B // bt
    row_chunk = _pick_row_chunk(S, I)

    # DFT matrices in bf16: Cs, -Ss (pre-negated), fused [Ch | Sh].
    cs, ss = _dft_cos_sin(S)
    ch, sh = _dft_cos_sin(H)
    cs = cs.astype(jnp.bfloat16)
    nss = (-ss).astype(jnp.bfloat16)
    chsh = jnp.concatenate([ch, sh], axis=1).astype(jnp.bfloat16)   # (H, 2H)

    # Pack the tiny per-layer H-vectors into one slab -> one DMA per step.
    pv = jnp.stack([params["ln1_g"], params["ln1_b"],
                    params["ln2_g"], params["ln2_b"],
                    params["bo"]], axis=1).astype(jnp.float32)       # (L, 5, H)
    bi = params["bi"].reshape(L, 1, I).astype(jnp.float32)

    x = hidden_states.astype(jnp.float32)

    # Advisory cost estimate (bf16 matmul FLOPs; per-layer weights are
    # re-streamed once per batch block).
    flops = L * B * (2 * S * H * (2 * H)        # hidden-stage DFT
                     + 2 * 2 * S * S * H        # seq-stage DFT (two matmuls)
                     + 2 * S * H * I            # Wi
                     + 2 * S * I * H)           # Wo
    transcendentals = L * B * S * I             # tanh in gelu_new
    bytes_accessed = int(
        2 * B * S * H * 4                                   # activations in/out
        + nb * L * (2 * H * I * 2 + (5 * H + I) * 4)        # weights per batch block
        + (2 * S * S + 2 * H * H) * 2)                      # bf16 DFT matrices

    sb = single_buffer_invariants
    grid_spec = pltpu.PrefetchScalarGridSpec(
        num_scalar_prefetch=0,
        grid=(nb, L),
        in_specs=[
            _maybe_single_buffered((bt, S, H), lambda b, l: (b, 0, 0), sb),  # x (used at layer 0)
            _maybe_single_buffered((S, S), lambda b, l: (0, 0), sb),         # cos (seq DFT)
            _maybe_single_buffered((S, S), lambda b, l: (0, 0), sb),         # -sin (seq DFT)
            _maybe_single_buffered((H, 2 * H), lambda b, l: (0, 0), sb),     # [cos|sin] (hidden DFT)
            pl.BlockSpec((1, 5, H), lambda b, l: (l, 0, 0)),                 # packed LN/bo vectors
            pl.BlockSpec((1, 1, I), lambda b, l: (l, 0, 0)),                 # bi
            pl.BlockSpec((1, H, I), lambda b, l: (l, 0, 0)),                 # Wi (bf16)
            pl.BlockSpec((1, I, H), lambda b, l: (l, 0, 0)),                 # Wo (bf16)
        ],
        out_specs=pl.BlockSpec((bt, S, H), lambda b, l: (b, 0, 0)),
    )

    kernel = functools.partial(_fnet_encoder_kernel, bt=bt, hidden=H,
                               row_chunk=row_chunk)

    return pl.pallas_call(
        kernel,
        out_shape=jax.ShapeDtypeStruct((B, S, H), jnp.float32),
        grid_spec=grid_spec,
        compiler_params=pltpu.CompilerParams(
            # batch-block axis parallel (megacore); layer axis carries state
            # in the resident output block -> must stay sequential.
            dimension_semantics=("parallel", "arbitrary"),
            vmem_limit_bytes=_pick_vmem_limit_bytes()),
        cost_estimate=pl.CostEstimate(
            flops=flops, transcendentals=transcendentals,
            bytes_accessed=bytes_accessed),
    )(x, cs, nss, chsh, pv, bi, params["wi"], params["wo"])


def init_params(key, num_layers, hidden, inter):
    """PyTorch-default Linear init; LN gamma=1, beta=0. FFN weights in bf16."""
    k1, k2, k3, k4 = jax.random.split(key, 4)
    s_h = 1.0 / math.sqrt(hidden)
    s_i = 1.0 / math.sqrt(inter)
    wi = jax.random.uniform(k1, (num_layers, hidden, inter), jnp.float32, -s_h, s_h)
    bi = jax.random.uniform(k2, (num_layers, inter), jnp.float32, -s_h, s_h)
    wo = jax.random.uniform(k3, (num_layers, inter, hidden), jnp.float32, -s_i, s_i)
    bo = jax.random.uniform(k4, (num_layers, hidden), jnp.float32, -s_i, s_i)
    return {
        "ln1_g": jnp.ones((num_layers, hidden), jnp.float32),
        "ln1_b": jnp.zeros((num_layers, hidden), jnp.float32),
        "ln2_g": jnp.ones((num_layers, hidden), jnp.float32),
        "ln2_b": jnp.zeros((num_layers, hidden), jnp.float32),
        "wi": wi.astype(jnp.bfloat16),
        "bi": bi,
        "wo": wo.astype(jnp.bfloat16),
        "bo": bo,
    }


def _reference(hidden_states, params):
    """Pure-JAX reference matching the PyTorch FNetEncoder forward."""
    L = params["wi"].shape[0]
    h = hidden_states.astype(jnp.float32)
    for l in range(L):
        f = jnp.real(jnp.fft.fftn(h, axes=(1, 2)))
        h1 = _layer_norm(h + f, params["ln1_g"][l], params["ln1_b"][l])
        inter = _gelu_new(h1 @ params["wi"][l].astype(jnp.float32)
                          + params["bi"][l])
        ffn = inter @ params["wo"][l].astype(jnp.float32) + params["bo"][l]
        h = _layer_norm(ffn + h1, params["ln2_g"][l], params["ln2_b"][l])
    return h


if __name__ == "__main__":
    batch, seq, hidden, inter, layers = 2, 8, 32, 128, 2

    key = jax.random.PRNGKey(0)
    kx, kp = jax.random.split(key)
    x = jax.random.normal(kx, (batch, seq, hidden), jnp.float32)
    params = init_params(kp, layers, hidden, inter)

    try:
        out = jax.block_until_ready(fnet_encoder(x, params))
    except Exception:
        # Robustness fallback: if this JAX build rejects single-buffered
        # BlockSpecs (pipeline_mode=pl.Buffered(1)), retry with the default
        # double buffering — identical numerics, slightly more VMEM.
        out = jax.block_until_ready(
            fnet_encoder(x, params, single_buffer_invariants=False))

    ref = _reference(x, params)
    assert out.shape == (batch, seq, hidden)
    # bf16 Fourier + FFN matmuls (f32 accumulation) vs the all-f32 reference.
    err = jnp.max(jnp.abs(out - ref))
    assert jnp.allclose(out, ref, atol=1e-1, rtol=5e-2), (
        f"mismatch vs reference, max abs err = {err}")

    print("KERNEL_OK")
</pallas_src>

<mosaic_0001>
module attributes {stable_mosaic.version = 11 : i64} {
  func.func @_fnet_encoder_kernel(%arg0: i32, %arg1: i32, %arg2: memref<2x8x32xf32, #tpu.memory_space<vmem>>, %arg3: memref<8x8xbf16, #tpu.memory_space<vmem>>, %arg4: memref<8x8xbf16, #tpu.memory_space<vmem>>, %arg5: memref<32x64xbf16, #tpu.memory_space<vmem>>, %arg6: memref<1x5x32xf32, #tpu.memory_space<vmem>>, %arg7: memref<1x1x128xf32, #tpu.memory_space<vmem>>, %arg8: memref<1x32x128xbf16, #tpu.memory_space<vmem>>, %arg9: memref<1x128x32xbf16, #tpu.memory_space<vmem>>, %arg10: memref<2x8x32xf32, #tpu.memory_space<vmem>>) attributes {dimension_semantics = [#tpu.dimension_semantics<parallel>, #tpu.dimension_semantics<arbitrary>], iteration_bounds = array<i64: 1, 2>, scalar_prefetch = 0 : i64, scratch_operands = 0 : i64, tpu.core_type = #tpu.core_type<tc>, window_params = [{pipeline_mode = #tpu.pipeline_mode<synchronous>, transform_indices = @transform_0, window_bounds = array<i64: 2, 8, 32>}, {pipeline_mode = #tpu.pipeline_mode<synchronous>, transform_indices = @transform_1, window_bounds = array<i64: 8, 8>}, {pipeline_mode = #tpu.pipeline_mode<synchronous>, transform_indices = @transform_2, window_bounds = array<i64: 8, 8>}, {pipeline_mode = #tpu.pipeline_mode<synchronous>, transform_indices = @transform_3, window_bounds = array<i64: 32, 64>}, {transform_indices = @transform_4, window_bounds = array<i64: 1, 5, 32>}, {transform_indices = @transform_5, window_bounds = array<i64: 1, 1, 128>}, {transform_indices = @transform_6, window_bounds = array<i64: 1, 32, 128>}, {transform_indices = @transform_7, window_bounds = array<i64: 1, 128, 32>}, {transform_indices = @transform_8, window_bounds = array<i64: 2, 8, 32>}]} {
    %c0_i32 = arith.constant 0 : i32
    %0 = arith.cmpi eq, %arg1, %c0_i32 : i32
    %1 = arith.extui %0 : i1 to i32
    %c0_i32_0 = arith.constant 0 : i32
    %2 = arith.cmpi ne, %1, %c0_i32_0 : i32
    scf.if %2 {
      %c0_66 = arith.constant 0 : index
      %c0_67 = arith.constant 0 : index
      %c0_68 = arith.constant 0 : index
      %189 = vector.load %arg2[%c0_66, %c0_67, %c0_68] : memref<2x8x32xf32, #tpu.memory_space<vmem>>, vector<2x8x32xf32>
      %c0_69 = arith.constant 0 : index
      %c0_70 = arith.constant 0 : index
      %c0_71 = arith.constant 0 : index
      %190 = vector.load %arg10[%c0_69, %c0_70, %c0_71] : memref<2x8x32xf32, #tpu.memory_space<vmem>>, vector<2x8x32xf32>
      tpu.vector_store %arg10[%c0_69, %c0_70, %c0_71], %189 {strides = array<i32>} : memref<2x8x32xf32, #tpu.memory_space<vmem>>, vector<2x8x32xf32>,
    } else {
    }
    %c0 = arith.constant 0 : index
    %c0_1 = arith.constant 0 : index
    %c0_2 = arith.constant 0 : index
    %3 = vector.load %arg6[%c0, %c0_1, %c0_2] : memref<1x5x32xf32, #tpu.memory_space<vmem>>, vector<1x5x32xf32>
    %4 = vector.shape_cast %3 : vector<1x5x32xf32> to vector<5x32xf32>
    %5 = vector.extract_strided_slice %4 {offsets = [0, 0], sizes = [1, 32], strides = [1, 1]} : vector<5x32xf32> to vector<1x32xf32>
    %6 = vector.extract_strided_slice %4 {offsets = [1, 0], sizes = [1, 32], strides = [1, 1]} : vector<5x32xf32> to vector<1x32xf32>
    %7 = vector.extract_strided_slice %4 {offsets = [2, 0], sizes = [1, 32], strides = [1, 1]} : vector<5x32xf32> to vector<1x32xf32>
    %8 = vector.extract_strided_slice %4 {offsets = [3, 0], sizes = [1, 32], strides = [1, 1]} : vector<5x32xf32> to vector<1x32xf32>
    %9 = vector.extract_strided_slice %4 {offsets = [4, 0], sizes = [1, 32], strides = [1, 1]} : vector<5x32xf32> to vector<1x32xf32>
    %c0_3 = arith.constant 0 : index
    %c0_4 = arith.constant 0 : index
    %c0_5 = arith.constant 0 : index
    %10 = vector.load %arg7[%c0_3, %c0_4, %c0_5] : memref<1x1x128xf32, #tpu.memory_space<vmem>>, vector<1x1x128xf32>
    %11 = vector.shape_cast %10 : vector<1x1x128xf32> to vector<1x128xf32>
    %c0_6 = arith.constant 0 : index
    %c0_7 = arith.constant 0 : index
    %c0_8 = arith.constant 0 : index
    %12 = vector.load %arg8[%c0_6, %c0_7, %c0_8] : memref<1x32x128xbf16, #tpu.memory_space<vmem>>, vector<1x32x128xbf16>
    %13 = vector.shape_cast %12 : vector<1x32x128xbf16> to vector<32x128xbf16>
    %c0_9 = arith.constant 0 : index
    %c0_10 = arith.constant 0 : index
    %c0_11 = arith.constant 0 : index
    %14 = vector.load %arg9[%c0_9, %c0_10, %c0_11] : memref<1x128x32xbf16, #tpu.memory_space<vmem>>, vector<1x128x32xbf16>
    %15 = vector.shape_cast %14 : vector<1x128x32xbf16> to vector<128x32xbf16>
    %c0_12 = arith.constant 0 : index
    %c0_13 = arith.constant 0 : index
    %16 = vector.load %arg3[%c0_12, %c0_13] : memref<8x8xbf16, #tpu.memory_space<vmem>>, vector<8x8xbf16>
    %c0_14 = arith.constant 0 : index
    %c0_15 = arith.constant 0 : index
    %17 = vector.load %arg4[%c0_14, %c0_15] : memref<8x8xbf16, #tpu.memory_space<vmem>>, vector<8x8xbf16>
    %c0_16 = arith.constant 0 : index
    %c0_17 = arith.constant 0 : index
    %18 = vector.load %arg5[%c0_16, %c0_17] : memref<32x64xbf16, #tpu.memory_space<vmem>>, vector<32x64xbf16>
    %c0_18 = arith.constant 0 : index
    %c0_19 = arith.constant 0 : index
    %c0_20 = arith.constant 0 : index
    %19 = vector.load %arg10[%c0_18, %c0_19, %c0_20] : memref<2x8x32xf32, #tpu.memory_space<vmem>>, vector<1x8x32xf32>
    %20 = vector.shape_cast %19 : vector<1x8x32xf32> to vector<8x32xf32>
    %21 = arith.truncf %20 : vector<8x32xf32> to vector<8x32xbf16>
    %cst = arith.constant dense<0.000000e+00> : vector<8x64xf32>
    %22 = tpu.matmul %21, %18, %cst {dimension_numbers = #tpu.dot_dimension_numbers<[1], [0], [0], [1], [0, 0, 1, 1], [], []>} : vector<8x32xbf16>, vector<32x64xbf16>, vector<8x64xf32> -> vector<8x64xf32>
    %23 = vector.extract_strided_slice %22 {offsets = [0, 0], sizes = [8, 32], strides = [1, 1]} : vector<8x64xf32> to vector<8x32xf32>
    %24 = arith.truncf %23 : vector<8x32xf32> to vector<8x32xbf16>
    %25 = vector.extract_strided_slice %22 {offsets = [0, 32], sizes = [8, 32], strides = [1, 1]} : vector<8x64xf32> to vector<8x32xf32>
    %26 = arith.truncf %25 : vector<8x32xf32> to vector<8x32xbf16>
    %cst_21 = arith.constant dense<0.000000e+00> : vector<8x32xf32>
    %27 = tpu.matmul %16, %24, %cst_21 {dimension_numbers = #tpu.dot_dimension_numbers<[1], [0], [0], [1], [0, 0, 1, 1], [], []>} : vector<8x8xbf16>, vector<8x32xbf16>, vector<8x32xf32> -> vector<8x32xf32>
    %cst_22 = arith.constant dense<0.000000e+00> : vector<8x32xf32>
    %28 = tpu.matmul %17, %26, %cst_22 {dimension_numbers = #tpu.dot_dimension_numbers<[1], [0], [0], [1], [0, 0, 1, 1], [], []>} : vector<8x8xbf16>, vector<8x32xbf16>, vector<8x32xf32> -> vector<8x32xf32>
    %29 = arith.addf %27, %28 : vector<8x32xf32>
    %30 = arith.addf %20, %29 : vector<8x32xf32>
    %cst_23 = arith.constant dense<0.000000e+00> : vector<8xf32>
    %31 = vector.multi_reduction <add>, %30, %cst_23 [1] : vector<8x32xf32> to vector<8xf32>
    %32 = vector.shape_cast %31 : vector<8xf32> to vector<8x1xf32>
    %cst_24 = arith.constant 3.200000e+01 : f32
    %33 = vector.broadcast %cst_24 : f32 to vector<8x1xf32>
    %34 = arith.divf %32, %33 : vector<8x1xf32>
    %35 = vector.broadcast %34 : vector<8x1xf32> to vector<8x32xf32>
    %36 = arith.subf %30, %35 : vector<8x32xf32>
    %37 = vector.broadcast %34 : vector<8x1xf32> to vector<8x32xf32>
    %38 = arith.subf %30, %37 : vector<8x32xf32>
    %39 = arith.mulf %36, %38 : vector<8x32xf32>
    %cst_25 = arith.constant dense<0.000000e+00> : vector<8xf32>
    %40 = vector.multi_reduction <add>, %39, %cst_25 [1] : vector<8x32xf32> to vector<8xf32>
    %41 = vector.shape_cast %40 : vector<8xf32> to vector<8x1xf32>
    %cst_26 = arith.constant 3.200000e+01 : f32
    %42 = vector.broadcast %cst_26 : f32 to vector<8x1xf32>
    %43 = arith.divf %41, %42 : vector<8x1xf32>
    %44 = vector.broadcast %34 : vector<8x1xf32> to vector<8x32xf32>
    %45 = arith.subf %30, %44 : vector<8x32xf32>
    %cst_27 = arith.constant 9.99999996E-13 : f32
    %46 = vector.broadcast %cst_27 : f32 to vector<8x1xf32>
    %47 = arith.addf %43, %46 : vector<8x1xf32>
    %48 = math.rsqrt %47 : vector<8x1xf32>
    %49 = vector.broadcast %48 : vector<8x1xf32> to vector<8x32xf32>
    %50 = arith.mulf %45, %49 : vector<8x32xf32>
    %51 = vector.broadcast %5 : vector<1x32xf32> to vector<8x32xf32>
    %52 = arith.mulf %50, %51 : vector<8x32xf32>
    %53 = vector.broadcast %6 : vector<1x32xf32> to vector<8x32xf32>
    %54 = arith.addf %52, %53 : vector<8x32xf32>
    %55 = arith.truncf %54 : vector<8x32xf32> to vector<8x32xbf16>
    %cst_28 = arith.constant dense<0.000000e+00> : vector<8x128xf32>
    %56 = tpu.matmul %55, %13, %cst_28 {dimension_numbers = #tpu.dot_dimension_numbers<[1], [0], [0], [1], [0, 0, 1, 1], [], []>} : vector<8x32xbf16>, vector<32x128xbf16>, vector<8x128xf32> -> vector<8x128xf32>
    %57 = vector.broadcast %11 : vector<1x128xf32> to vector<8x128xf32>
    %58 = arith.addf %56, %57 : vector<8x128xf32>
    %cst_29 = arith.constant 5.000000e-01 : f32
    %59 = vector.broadcast %cst_29 : f32 to vector<8x128xf32>
    %60 = arith.mulf %59, %58 : vector<8x128xf32>
    %cst_30 = arith.constant 4.471500e-02 : f32
    %61 = vector.broadcast %cst_30 : f32 to vector<8x128xf32>
    %62 = arith.mulf %61, %58 : vector<8x128xf32>
    %63 = arith.mulf %62, %58 : vector<8x128xf32>
    %64 = arith.mulf %63, %58 : vector<8x128xf32>
    %65 = arith.addf %58, %64 : vector<8x128xf32>
    %cst_31 = arith.constant 0.797884583 : f32
    %66 = vector.broadcast %cst_31 : f32 to vector<8x128xf32>
    %67 = arith.mulf %66, %65 : vector<8x128xf32>
    %68 = math.tanh %67 : vector<8x128xf32>
    %cst_32 = arith.constant 1.000000e+00 : f32
    %69 = vector.broadcast %cst_32 : f32 to vector<8x128xf32>
    %70 = arith.addf %69, %68 : vector<8x128xf32>
    %71 = arith.mulf %60, %70 : vector<8x128xf32>
    %72 = arith.truncf %71 : vector<8x128xf32> to vector<8x128xbf16>
    %cst_33 = arith.constant dense<0.000000e+00> : vector<8x32xf32>
    %73 = tpu.matmul %72, %15, %cst_33 {dimension_numbers = #tpu.dot_dimension_numbers<[1], [0], [0], [1], [0, 0, 1, 1], [], []>} : vector<8x128xbf16>, vector<128x32xbf16>, vector<8x32xf32> -> vector<8x32xf32>
    %74 = vector.broadcast %9 : vector<1x32xf32> to vector<8x32xf32>
    %75 = arith.addf %73, %74 : vector<8x32xf32>
    %76 = arith.addf %75, %54 : vector<8x32xf32>
    %cst_34 = arith.constant dense<0.000000e+00> : vector<8xf32>
    %77 = vector.multi_reduction <add>, %76, %cst_34 [1] : vector<8x32xf32> to vector<8xf32>
    %78 = vector.shape_cast %77 : vector<8xf32> to vector<8x1xf32>
    %cst_35 = arith.constant 3.200000e+01 : f32
    %79 = vector.broadcast %cst_35 : f32 to vector<8x1xf32>
    %80 = arith.divf %78, %79 : vector<8x1xf32>
    %81 = vector.broadcast %80 : vector<8x1xf32> to vector<8x32xf32>
    %82 = arith.subf %76, %81 : vector<8x32xf32>
    %83 = vector.broadcast %80 : vector<8x1xf32> to vector<8x32xf32>
    %84 = arith.subf %76, %83 : vector<8x32xf32>
    %85 = arith.mulf %82, %84 : vector<8x32xf32>
    %cst_36 = arith.constant dense<0.000000e+00> : vector<8xf32>
    %86 = vector.multi_reduction <add>, %85, %cst_36 [1] : vector<8x32xf32> to vector<8xf32>
    %87 = vector.shape_cast %86 : vector<8xf32> to vector<8x1xf32>
    %cst_37 = arith.constant 3.200000e+01 : f32
    %88 = vector.broadcast %cst_37 : f32 to vector<8x1xf32>
    %89 = arith.divf %87, %88 : vector<8x1xf32>
    %90 = vector.broadcast %80 : vector<8x1xf32> to vector<8x32xf32>
    %91 = arith.subf %76, %90 : vector<8x32xf32>
    %cst_38 = arith.constant 9.99999996E-13 : f32
    %92 = vector.broadcast %cst_38 : f32 to vector<8x1xf32>
    %93 = arith.addf %89, %92 : vector<8x1xf32>
    %94 = math.rsqrt %93 : vector<8x1xf32>
    %95 = vector.broadcast %94 : vector<8x1xf32> to vector<8x32xf32>
    %96 = arith.mulf %91, %95 : vector<8x32xf32>
    %97 = vector.broadcast %7 : vector<1x32xf32> to vector<8x32xf32>
    %98 = arith.mulf %96, %97 : vector<8x32xf32>
    %99 = vector.broadcast %8 : vector<1x32xf32> to vector<8x32xf32>
    %100 = arith.addf %98, %99 : vector<8x32xf32>
    %c0_39 = arith.constant 0 : index
    %c0_40 = arith.constant 0 : index
    %c0_41 = arith.constant 0 : index
    %101 = vector.load %arg10[%c0_39, %c0_40, %c0_41] : memref<2x8x32xf32, #tpu.memory_space<vmem>>, vector<1x8x32xf32>
    %102 = vector.shape_cast %101 : vector<1x8x32xf32> to vector<8x32xf32>
    %103 = vector.shape_cast %100 : vector<8x32xf32> to vector<1x8x32xf32>
    tpu.vector_store %arg10[%c0_39, %c0_40, %c0_41], %103 {strides = array<i32>} : memref<2x8x32xf32, #tpu.memory_space<vmem>>, vector<1x8x32xf32>,
    %c1 = arith.constant 1 : index
    %c0_42 = arith.constant 0 : index
    %c0_43 = arith.constant 0 : index
    %104 = vector.load %arg10[%c1, %c0_42, %c0_43] : memref<2x8x32xf32, #tpu.memory_space<vmem>>, vector<1x8x32xf32>
    %105 = vector.shape_cast %104 : vector<1x8x32xf32> to vector<8x32xf32>
    %106 = arith.truncf %105 : vector<8x32xf32> to vector<8x32xbf16>
    %cst_44 = arith.constant dense<0.000000e+00> : vector<8x64xf32>
    %107 = tpu.matmul %106, %18, %cst_44 {dimension_numbers = #tpu.dot_dimension_numbers<[1], [0], [0], [1], [0, 0, 1, 1], [], []>} : vector<8x32xbf16>, vector<32x64xbf16>, vector<8x64xf32> -> vector<8x64xf32>
    %108 = vector.extract_strided_slice %107 {offsets = [0, 0], sizes = [8, 32], strides = [1, 1]} : vector<8x64xf32> to vector<8x32xf32>
    %109 = arith.truncf %108 : vector<8x32xf32> to vector<8x32xbf16>
    %110 = vector.extract_strided_slice %107 {offsets = [0, 32], sizes = [8, 32], strides = [1, 1]} : vector<8x64xf32> to vector<8x32xf32>
    %111 = arith.truncf %110 : vector<8x32xf32> to vector<8x32xbf16>
    %cst_45 = arith.constant dense<0.000000e+00> : vector<8x32xf32>
    %112 = tpu.matmul %16, %109, %cst_45 {dimension_numbers = #tpu.dot_dimension_numbers<[1], [0], [0], [1], [0, 0, 1, 1], [], []>} : vector<8x8xbf16>, vector<8x32xbf16>, vector<8x32xf32> -> vector<8x32xf32>
    %cst_46 = arith.constant dense<0.000000e+00> : vector<8x32xf32>
    %113 = tpu.matmul %17, %111, %cst_46 {dimension_numbers = #tpu.dot_dimension_numbers<[1], [0], [0], [1], [0, 0, 1, 1], [], []>} : vector<8x8xbf16>, vector<8x32xbf16>, vector<8x32xf32> -> vector<8x32xf32>
    %114 = arith.addf %112, %113 : vector<8x32xf32>
    %115 = arith.addf %105, %114 : vector<8x32xf32>
    %cst_47 = arith.constant dense<0.000000e+00> : vector<8xf32>
    %116 = vector.multi_reduction <add>, %115, %cst_47 [1] : vector<8x32xf32> to vector<8xf32>
    %117 = vector.shape_cast %116 : vector<8xf32> to vector<8x1xf32>
    %cst_48 = arith.constant 3.200000e+01 : f32
    %118 = vector.broadcast %cst_48 : f32 to vector<8x1xf32>
    %119 = arith.divf %117, %118 : vector<8x1xf32>
    %120 = vector.broadcast %119 : vector<8x1xf32> to vector<8x32xf32>
    %121 = arith.subf %115, %120 : vector<8x32xf32>
    %122 = vector.broadcast %119 : vector<8x1xf32> to vector<8x32xf32>
    %123 = arith.subf %115, %122 : vector<8x32xf32>
    %124 = arith.mulf %121, %123 : vector<8x32xf32>
    %cst_49 = arith.constant dense<0.000000e+00> : vector<8xf32>
    %125 = vector.multi_reduction <add>, %124, %cst_49 [1] : vector<8x32xf32> to vector<8xf32>
    %126 = vector.shape_cast %125 : vector<8xf32> to vector<8x1xf32>
    %cst_50 = arith.constant 3.200000e+01 : f32
    %127 = vector.broadcast %cst_50 : f32 to vector<8x1xf32>
    %128 = arith.divf %126, %127 : vector<8x1xf32>
    %129 = vector.broadcast %119 : vector<8x1xf32> to vector<8x32xf32>
    %130 = arith.subf %115, %129 : vector<8x32xf32>
    %cst_51 = arith.constant 9.99999996E-13 : f32
    %131 = vector.broadcast %cst_51 : f32 to vector<8x1xf32>
    %132 = arith.addf %128, %131 : vector<8x1xf32>
    %133 = math.rsqrt %132 : vector<8x1xf32>
    %134 = vector.broadcast %133 : vector<8x1xf32> to vector<8x32xf32>
    %135 = arith.mulf %130, %134 : vector<8x32xf32>
    %136 = vector.broadcast %5 : vector<1x32xf32> to vector<8x32xf32>
    %137 = arith.mulf %135, %136 : vector<8x32xf32>
    %138 = vector.broadcast %6 : vector<1x32xf32> to vector<8x32xf32>
    %139 = arith.addf %137, %138 : vector<8x32xf32>
    %140 = arith.truncf %139 : vector<8x32xf32> to vector<8x32xbf16>
    %cst_52 = arith.constant dense<0.000000e+00> : vector<8x128xf32>
    %141 = tpu.matmul %140, %13, %cst_52 {dimension_numbers = #tpu.dot_dimension_numbers<[1], [0], [0], [1], [0, 0, 1, 1], [], []>} : vector<8x32xbf16>, vector<32x128xbf16>, vector<8x128xf32> -> vector<8x128xf32>
    %142 = vector.broadcast %11 : vector<1x128xf32> to vector<8x128xf32>
    %143 = arith.addf %141, %142 : vector<8x128xf32>
    %cst_53 = arith.constant 5.000000e-01 : f32
    %144 = vector.broadcast %cst_53 : f32 to vector<8x128xf32>
    %145 = arith.mulf %144, %143 : vector<8x128xf32>
    %cst_54 = arith.constant 4.471500e-02 : f32
    %146 = vector.broadcast %cst_54 : f32 to vector<8x128xf32>
    %147 = arith.mulf %146, %143 : vector<8x128xf32>
    %148 = arith.mulf %147, %143 : vector<8x128xf32>
    %149 = arith.mulf %148, %143 : vector<8x128xf32>
    %150 = arith.addf %143, %149 : vector<8x128xf32>
    %cst_55 = arith.constant 0.797884583 : f32
    %151 = vector.broadcast %cst_55 : f32 to vector<8x128xf32>
    %152 = arith.mulf %151, %150 : vector<8x128xf32>
    %153 = math.tanh %152 : vector<8x128xf32>
    %cst_56 = arith.constant 1.000000e+00 : f32
    %154 = vector.broadcast %cst_56 : f32 to vector<8x128xf32>
    %155 = arith.addf %154, %153 : vector<8x128xf32>
    %156 = arith.mulf %145, %155 : vector<8x128xf32>
    %157 = arith.truncf %156 : vector<8x128xf32> to vector<8x128xbf16>
    %cst_57 = arith.constant dense<0.000000e+00> : vector<8x32xf32>
    %158 = tpu.matmul %157, %15, %cst_57 {dimension_numbers = #tpu.dot_dimension_numbers<[1], [0], [0], [1], [0, 0, 1, 1], [], []>} : vector<8x128xbf16>, vector<128x32xbf16>, vector<8x32xf32> -> vector<8x32xf32>
    %159 = vector.broadcast %9 : vector<1x32xf32> to vector<8x32xf32>
    %160 = arith.addf %158, %159 : vector<8x32xf32>
    %161 = arith.addf %160, %139 : vector<8x32xf32>
    %cst_58 = arith.constant dense<0.000000e+00> : vector<8xf32>
    %162 = vector.multi_reduction <add>, %161, %cst_58 [1] : vector<8x32xf32> to vector<8xf32>
    %163 = vector.shape_cast %162 : vector<8xf32> to vector<8x1xf32>
    %cst_59 = arith.constant 3.200000e+01 : f32
    %164 = vector.broadcast %cst_59 : f32 to vector<8x1xf32>
    %165 = arith.divf %163, %164 : vector<8x1xf32>
    %166 = vector.broadcast %165 : vector<8x1xf32> to vector<8x32xf32>
    %167 = arith.subf %161, %166 : vector<8x32xf32>
    %168 = vector.broadcast %165 : vector<8x1xf32> to vector<8x32xf32>
    %169 = arith.subf %161, %168 : vector<8x32xf32>
    %170 = arith.mulf %167, %169 : vector<8x32xf32>
    %cst_60 = arith.constant dense<0.000000e+00> : vector<8xf32>
    %171 = vector.multi_reduction <add>, %170, %cst_60 [1] : vector<8x32xf32> to vector<8xf32>
    %172 = vector.shape_cast %171 : vector<8xf32> to vector<8x1xf32>
    %cst_61 = arith.constant 3.200000e+01 : f32
    %173 = vector.broadcast %cst_61 : f32 to vector<8x1xf32>
    %174 = arith.divf %172, %173 : vector<8x1xf32>
    %175 = vector.broadcast %165 : vector<8x1xf32> to vector<8x32xf32>
    %176 = arith.subf %161, %175 : vector<8x32xf32>
    %cst_62 = arith.constant 9.99999996E-13 : f32
    %177 = vector.broadcast %cst_62 : f32 to vector<8x1xf32>
    %178 = arith.addf %174, %177 : vector<8x1xf32>
    %179 = math.rsqrt %178 : vector<8x1xf32>
    %180 = vector.broadcast %179 : vector<8x1xf32> to vector<8x32xf32>
    %181 = arith.mulf %176, %180 : vector<8x32xf32>
    %182 = vector.broadcast %7 : vector<1x32xf32> to vector<8x32xf32>
    %183 = arith.mulf %181, %182 : vector<8x32xf32>
    %184 = vector.broadcast %8 : vector<1x32xf32> to vector<8x32xf32>
    %185 = arith.addf %183, %184 : vector<8x32xf32>
    %c1_63 = arith.constant 1 : index
    %c0_64 = arith.constant 0 : index
    %c0_65 = arith.constant 0 : index
    %186 = vector.load %arg10[%c1_63, %c0_64, %c0_65] : memref<2x8x32xf32, #tpu.memory_space<vmem>>, vector<1x8x32xf32>
    %187 = vector.shape_cast %186 : vector<1x8x32xf32> to vector<8x32xf32>
    %188 = vector.shape_cast %185 : vector<8x32xf32> to vector<1x8x32xf32>
    tpu.vector_store %arg10[%c1_63, %c0_64, %c0_65], %188 {strides = array<i32>} : memref<2x8x32xf32, #tpu.memory_space<vmem>>, vector<1x8x32xf32>,
    return
  }
  func.func @transform_0(%arg0: i32, %arg1: i32) -> (i32, i32, i32) {
    %c0_i32 = arith.constant 0 : i32
    %c0_i32_0 = arith.constant 0 : i32
    %c0_i32_1 = arith.constant 0 : i32
    return %arg0, %c0_i32, %c0_i32_0 : i32, i32, i32
  }
  func.func @transform_1(%arg0: i32, %arg1: i32) -> (i32, i32) {
    %c0_i32 = arith.constant 0 : i32
    %c0_i32_0 = arith.constant 0 : i32
    %c0_i32_1 = arith.constant 0 : i32
    return %c0_i32, %c0_i32_0 : i32, i32
  }
  func.func @transform_2(%arg0: i32, %arg1: i32) -> (i32, i32) {
    %c0_i32 = arith.constant 0 : i32
    %c0_i32_0 = arith.constant 0 : i32
    %c0_i32_1 = arith.constant 0 : i32
    return %c0_i32, %c0_i32_0 : i32, i32
  }
  func.func @transform_3(%arg0: i32, %arg1: i32) -> (i32, i32) {
    %c0_i32 = arith.constant 0 : i32
    %c0_i32_0 = arith.constant 0 : i32
    %c0_i32_1 = arith.constant 0 : i32
    return %c0_i32, %c0_i32_0 : i32, i32
  }
  func.func @transform_4(%arg0: i32, %arg1: i32) -> (i32, i32, i32) {
    %c0_i32 = arith.constant 0 : i32
    %c0_i32_0 = arith.constant 0 : i32
    %c0_i32_1 = arith.constant 0 : i32
    return %arg1, %c0_i32, %c0_i32_0 : i32, i32, i32
  }
  func.func @transform_5(%arg0: i32, %arg1: i32) -> (i32, i32, i32) {
    %c0_i32 = arith.constant 0 : i32
    %c0_i32_0 = arith.constant 0 : i32
    %c0_i32_1 = arith.constant 0 : i32
    return %arg1, %c0_i32, %c0_i32_0 : i32, i32, i32
  }
  func.func @transform_6(%arg0: i32, %arg1: i32) -> (i32, i32, i32) {
    %c0_i32 = arith.constant 0 : i32
    %c0_i32_0 = arith.constant 0 : i32
    %c0_i32_1 = arith.constant 0 : i32
    return %arg1, %c0_i32, %c0_i32_0 : i32, i32, i32
  }
  func.func @transform_7(%arg0: i32, %arg1: i32) -> (i32, i32, i32) {
    %c0_i32 = arith.constant 0 : i32
    %c0_i32_0 = arith.constant 0 : i32
    %c0_i32_1 = arith.constant 0 : i32
    return %arg1, %c0_i32, %c0_i32_0 : i32, i32, i32
  }
  func.func @transform_8(%arg0: i32, %arg1: i32) -> (i32, i32, i32) {
    %c0_i32 = arith.constant 0 : i32
    %c0_i32_0 = arith.constant 0 : i32
    %c0_i32_1 = arith.constant 0 : i32
    return %arg0, %c0_i32, %c0_i32_0 : i32, i32, i32
  }
}

module attributes {stable_mosaic.version = 11 : i64} {
  func.func @_fnet_encoder_kernel(%arg0: i32, %arg1: i32, %arg2: memref<2x8x32xf32, #tpu.memory_space<vmem>>, %arg3: memref<8x8xbf16, #tpu.memory_space<vmem>>, %arg4: memref<8x8xbf16, #tpu.memory_space<vmem>>, %arg5: memref<32x64xbf16, #tpu.memory_space<vmem>>, %arg6: memref<1x5x32xf32, #tpu.memory_space<vmem>>, %arg7: memref<1x1x128xf32, #tpu.memory_space<vmem>>, %arg8: memref<1x32x128xbf16, #tpu.memory_space<vmem>>, %arg9: memref<1x128x32xbf16, #tpu.memory_space<vmem>>, %arg10: memref<2x8x32xf32, #tpu.memory_space<vmem>>) attributes {dimension_semantics = [#tpu.dimension_semantics<parallel>, #tpu.dimension_semantics<arbitrary>], iteration_bounds = array<i64: 1, 2>, scalar_prefetch = 0 : i64, scratch_operands = 0 : i64, tpu.core_type = #tpu.core_type<tc>, window_params = [{transform_indices = @transform_0, window_bounds = array<i64: 2, 8, 32>}, {pipeline_mode = #tpu.pipeline_mode<synchronous>, transform_indices = @transform_1, window_bounds = array<i64: 8, 8>}, {pipeline_mode = #tpu.pipeline_mode<synchronous>, transform_indices = @transform_2, window_bounds = array<i64: 8, 8>}, {pipeline_mode = #tpu.pipeline_mode<synchronous>, transform_indices = @transform_3, window_bounds = array<i64: 32, 64>}, {transform_indices = @transform_4, window_bounds = array<i64: 1, 5, 32>}, {transform_indices = @transform_5, window_bounds = array<i64: 1, 1, 128>}, {transform_indices = @transform_6, window_bounds = array<i64: 1, 32, 128>}, {transform_indices = @transform_7, window_bounds = array<i64: 1, 128, 32>}, {transform_indices = @transform_8, window_bounds = array<i64: 2, 8, 32>}]} {
    %c0_i32 = arith.constant 0 : i32
    %0 = arith.cmpi eq, %arg1, %c0_i32 : i32
    %1 = arith.extui %0 : i1 to i32
    %c0_i32_0 = arith.constant 0 : i32
    %2 = arith.cmpi ne, %1, %c0_i32_0 : i32
    scf.if %2 {
      %c0_66 = arith.constant 0 : index
      %c0_67 = arith.constant 0 : index
      %c0_68 = arith.constant 0 : index
      %189 = vector.load %arg2[%c0_66, %c0_67, %c0_68] : memref<2x8x32xf32, #tpu.memory_space<vmem>>, vector<2x8x32xf32>
      %c0_69 = arith.constant 0 : index
      %c0_70 = arith.constant 0 : index
      %c0_71 = arith.constant 0 : index
      %190 = vector.load %arg10[%c0_69, %c0_70, %c0_71] : memref<2x8x32xf32, #tpu.memory_space<vmem>>, vector<2x8x32xf32>
      tpu.vector_store %arg10[%c0_69, %c0_70, %c0_71], %189 {strides = array<i32>} : memref<2x8x32xf32, #tpu.memory_space<vmem>>, vector<2x8x32xf32>,
    } else {
    }
    %c0 = arith.constant 0 : index
    %c0_1 = arith.constant 0 : index
    %c0_2 = arith.constant 0 : index
    %3 = vector.load %arg6[%c0, %c0_1, %c0_2] : memref<1x5x32xf32, #tpu.memory_space<vmem>>, vector<1x5x32xf32>
    %4 = vector.shape_cast %3 : vector<1x5x32xf32> to vector<5x32xf32>
    %5 = vector.extract_strided_slice %4 {offsets = [0, 0], sizes = [1, 32], strides = [1, 1]} : vector<5x32xf32> to vector<1x32xf32>
    %6 = vector.extract_strided_slice %4 {offsets = [1, 0], sizes = [1, 32], strides = [1, 1]} : vector<5x32xf32> to vector<1x32xf32>
    %7 = vector.extract_strided_slice %4 {offsets = [2, 0], sizes = [1, 32], strides = [1, 1]} : vector<5x32xf32> to vector<1x32xf32>
    %8 = vector.extract_strided_slice %4 {offsets = [3, 0], sizes = [1, 32], strides = [1, 1]} : vector<5x32xf32> to vector<1x32xf32>
    %9 = vector.extract_strided_slice %4 {offsets = [4, 0], sizes = [1, 32], strides = [1, 1]} : vector<5x32xf32> to vector<1x32xf32>
    %c0_3 = arith.constant 0 : index
    %c0_4 = arith.constant 0 : index
    %c0_5 = arith.constant 0 : index
    %10 = vector.load %arg7[%c0_3, %c0_4, %c0_5] : memref<1x1x128xf32, #tpu.memory_space<vmem>>, vector<1x1x128xf32>
    %11 = vector.shape_cast %10 : vector<1x1x128xf32> to vector<1x128xf32>
    %c0_6 = arith.constant 0 : index
    %c0_7 = arith.constant 0 : index
    %c0_8 = arith.constant 0 : index
    %12 = vector.load %arg8[%c0_6, %c0_7, %c0_8] : memref<1x32x128xbf16, #tpu.memory_space<vmem>>, vector<1x32x128xbf16>
    %13 = vector.shape_cast %12 : vector<1x32x128xbf16> to vector<32x128xbf16>
    %c0_9 = arith.constant 0 : index
    %c0_10 = arith.constant 0 : index
    %c0_11 = arith.constant 0 : index
    %14 = vector.load %arg9[%c0_9, %c0_10, %c0_11] : memref<1x128x32xbf16, #tpu.memory_space<vmem>>, vector<1x128x32xbf16>
    %15 = vector.shape_cast %14 : vector<1x128x32xbf16> to vector<128x32xbf16>
    %c0_12 = arith.constant 0 : index
    %c0_13 = arith.constant 0 : index
    %16 = vector.load %arg3[%c0_12, %c0_13] : memref<8x8xbf16, #tpu.memory_space<vmem>>, vector<8x8xbf16>
    %c0_14 = arith.constant 0 : index
    %c0_15 = arith.constant 0 : index
    %17 = vector.load %arg4[%c0_14, %c0_15] : memref<8x8xbf16, #tpu.memory_space<vmem>>, vector<8x8xbf16>
    %c0_16 = arith.constant 0 : index
    %c0_17 = arith.constant 0 : index
    %18 = vector.load %arg5[%c0_16, %c0_17] : memref<32x64xbf16, #tpu.memory_space<vmem>>, vector<32x64xbf16>
    %c0_18 = arith.constant 0 : index
    %c0_19 = arith.constant 0 : index
    %c0_20 = arith.constant 0 : index
    %19 = vector.load %arg10[%c0_18, %c0_19, %c0_20] : memref<2x8x32xf32, #tpu.memory_space<vmem>>, vector<1x8x32xf32>
    %20 = vector.shape_cast %19 : vector<1x8x32xf32> to vector<8x32xf32>
    %21 = arith.truncf %20 : vector<8x32xf32> to vector<8x32xbf16>
    %cst = arith.constant dense<0.000000e+00> : vector<8x64xf32>
    %22 = tpu.matmul %21, %18, %cst {dimension_numbers = #tpu.dot_dimension_numbers<[1], [0], [0], [1], [0, 0, 1, 1], [], []>} : vector<8x32xbf16>, vector<32x64xbf16>, vector<8x64xf32> -> vector<8x64xf32>
    %23 = vector.extract_strided_slice %22 {offsets = [0, 0], sizes = [8, 32], strides = [1, 1]} : vector<8x64xf32> to vector<8x32xf32>
    %24 = arith.truncf %23 : vector<8x32xf32> to vector<8x32xbf16>
    %25 = vector.extract_strided_slice %22 {offsets = [0, 32], sizes = [8, 32], strides = [1, 1]} : vector<8x64xf32> to vector<8x32xf32>
    %26 = arith.truncf %25 : vector<8x32xf32> to vector<8x32xbf16>
    %cst_21 = arith.constant dense<0.000000e+00> : vector<8x32xf32>
    %27 = tpu.matmul %16, %24, %cst_21 {dimension_numbers = #tpu.dot_dimension_numbers<[1], [0], [0], [1], [0, 0, 1, 1], [], []>} : vector<8x8xbf16>, vector<8x32xbf16>, vector<8x32xf32> -> vector<8x32xf32>
    %cst_22 = arith.constant dense<0.000000e+00> : vector<8x32xf32>
    %28 = tpu.matmul %17, %26, %cst_22 {dimension_numbers = #tpu.dot_dimension_numbers<[1], [0], [0], [1], [0, 0, 1, 1], [], []>} : vector<8x8xbf16>, vector<8x32xbf16>, vector<8x32xf32> -> vector<8x32xf32>
    %29 = arith.addf %27, %28 : vector<8x32xf32>
    %30 = arith.addf %20, %29 : vector<8x32xf32>
    %cst_23 = arith.constant dense<0.000000e+00> : vector<8xf32>
    %31 = vector.multi_reduction <add>, %30, %cst_23 [1] : vector<8x32xf32> to vector<8xf32>
    %32 = vector.shape_cast %31 : vector<8xf32> to vector<8x1xf32>
    %cst_24 = arith.constant 3.200000e+01 : f32
    %33 = vector.broadcast %cst_24 : f32 to vector<8x1xf32>
    %34 = arith.divf %32, %33 : vector<8x1xf32>
    %35 = vector.broadcast %34 : vector<8x1xf32> to vector<8x32xf32>
    %36 = arith.subf %30, %35 : vector<8x32xf32>
    %37 = vector.broadcast %34 : vector<8x1xf32> to vector<8x32xf32>
    %38 = arith.subf %30, %37 : vector<8x32xf32>
    %39 = arith.mulf %36, %38 : vector<8x32xf32>
    %cst_25 = arith.constant dense<0.000000e+00> : vector<8xf32>
    %40 = vector.multi_reduction <add>, %39, %cst_25 [1] : vector<8x32xf32> to vector<8xf32>
    %41 = vector.shape_cast %40 : vector<8xf32> to vector<8x1xf32>
    %cst_26 = arith.constant 3.200000e+01 : f32
    %42 = vector.broadcast %cst_26 : f32 to vector<8x1xf32>
    %43 = arith.divf %41, %42 : vector<8x1xf32>
    %44 = vector.broadcast %34 : vector<8x1xf32> to vector<8x32xf32>
    %45 = arith.subf %30, %44 : vector<8x32xf32>
    %cst_27 = arith.constant 9.99999996E-13 : f32
    %46 = vector.broadcast %cst_27 : f32 to vector<8x1xf32>
    %47 = arith.addf %43, %46 : vector<8x1xf32>
    %48 = math.rsqrt %47 : vector<8x1xf32>
    %49 = vector.broadcast %48 : vector<8x1xf32> to vector<8x32xf32>
    %50 = arith.mulf %45, %49 : vector<8x32xf32>
    %51 = vector.broadcast %5 : vector<1x32xf32> to vector<8x32xf32>
    %52 = arith.mulf %50, %51 : vector<8x32xf32>
    %53 = vector.broadcast %6 : vector<1x32xf32> to vector<8x32xf32>
    %54 = arith.addf %52, %53 : vector<8x32xf32>
    %55 = arith.truncf %54 : vector<8x32xf32> to vector<8x32xbf16>
    %cst_28 = arith.constant dense<0.000000e+00> : vector<8x128xf32>
    %56 = tpu.matmul %55, %13, %cst_28 {dimension_numbers = #tpu.dot_dimension_numbers<[1], [0], [0], [1], [0, 0, 1, 1], [], []>} : vector<8x32xbf16>, vector<32x128xbf16>, vector<8x128xf32> -> vector<8x128xf32>
    %57 = vector.broadcast %11 : vector<1x128xf32> to vector<8x128xf32>
    %58 = arith.addf %56, %57 : vector<8x128xf32>
    %cst_29 = arith.constant 5.000000e-01 : f32
    %59 = vector.broadcast %cst_29 : f32 to vector<8x128xf32>
    %60 = arith.mulf %59, %58 : vector<8x128xf32>
    %cst_30 = arith.constant 4.471500e-02 : f32
    %61 = vector.broadcast %cst_30 : f32 to vector<8x128xf32>
    %62 = arith.mulf %61, %58 : vector<8x128xf32>
    %63 = arith.mulf %62, %58 : vector<8x128xf32>
    %64 = arith.mulf %63, %58 : vector<8x128xf32>
    %65 = arith.addf %58, %64 : vector<8x128xf32>
    %cst_31 = arith.constant 0.797884583 : f32
    %66 = vector.broadcast %cst_31 : f32 to vector<8x128xf32>
    %67 = arith.mulf %66, %65 : vector<8x128xf32>
    %68 = math.tanh %67 : vector<8x128xf32>
    %cst_32 = arith.constant 1.000000e+00 : f32
    %69 = vector.broadcast %cst_32 : f32 to vector<8x128xf32>
    %70 = arith.addf %69, %68 : vector<8x128xf32>
    %71 = arith.mulf %60, %70 : vector<8x128xf32>
    %72 = arith.truncf %71 : vector<8x128xf32> to vector<8x128xbf16>
    %cst_33 = arith.constant dense<0.000000e+00> : vector<8x32xf32>
    %73 = tpu.matmul %72, %15, %cst_33 {dimension_numbers = #tpu.dot_dimension_numbers<[1], [0], [0], [1], [0, 0, 1, 1], [], []>} : vector<8x128xbf16>, vector<128x32xbf16>, vector<8x32xf32> -> vector<8x32xf32>
    %74 = vector.broadcast %9 : vector<1x32xf32> to vector<8x32xf32>
    %75 = arith.addf %73, %74 : vector<8x32xf32>
    %76 = arith.addf %75, %54 : vector<8x32xf32>
    %cst_34 = arith.constant dense<0.000000e+00> : vector<8xf32>
    %77 = vector.multi_reduction <add>, %76, %cst_34 [1] : vector<8x32xf32> to vector<8xf32>
    %78 = vector.shape_cast %77 : vector<8xf32> to vector<8x1xf32>
    %cst_35 = arith.constant 3.200000e+01 : f32
    %79 = vector.broadcast %cst_35 : f32 to vector<8x1xf32>
    %80 = arith.divf %78, %79 : vector<8x1xf32>
    %81 = vector.broadcast %80 : vector<8x1xf32> to vector<8x32xf32>
    %82 = arith.subf %76, %81 : vector<8x32xf32>
    %83 = vector.broadcast %80 : vector<8x1xf32> to vector<8x32xf32>
    %84 = arith.subf %76, %83 : vector<8x32xf32>
    %85 = arith.mulf %82, %84 : vector<8x32xf32>
    %cst_36 = arith.constant dense<0.000000e+00> : vector<8xf32>
    %86 = vector.multi_reduction <add>, %85, %cst_36 [1] : vector<8x32xf32> to vector<8xf32>
    %87 = vector.shape_cast %86 : vector<8xf32> to vector<8x1xf32>
    %cst_37 = arith.constant 3.200000e+01 : f32
    %88 = vector.broadcast %cst_37 : f32 to vector<8x1xf32>
    %89 = arith.divf %87, %88 : vector<8x1xf32>
    %90 = vector.broadcast %80 : vector<8x1xf32> to vector<8x32xf32>
    %91 = arith.subf %76, %90 : vector<8x32xf32>
    %cst_38 = arith.constant 9.99999996E-13 : f32
    %92 = vector.broadcast %cst_38 : f32 to vector<8x1xf32>
    %93 = arith.addf %89, %92 : vector<8x1xf32>
    %94 = math.rsqrt %93 : vector<8x1xf32>
    %95 = vector.broadcast %94 : vector<8x1xf32> to vector<8x32xf32>
    %96 = arith.mulf %91, %95 : vector<8x32xf32>
    %97 = vector.broadcast %7 : vector<1x32xf32> to vector<8x32xf32>
    %98 = arith.mulf %96, %97 : vector<8x32xf32>
    %99 = vector.broadcast %8 : vector<1x32xf32> to vector<8x32xf32>
    %100 = arith.addf %98, %99 : vector<8x32xf32>
    %c0_39 = arith.constant 0 : index
    %c0_40 = arith.constant 0 : index
    %c0_41 = arith.constant 0 : index
    %101 = vector.load %arg10[%c0_39, %c0_40, %c0_41] : memref<2x8x32xf32, #tpu.memory_space<vmem>>, vector<1x8x32xf32>
    %102 = vector.shape_cast %101 : vector<1x8x32xf32> to vector<8x32xf32>
    %103 = vector.shape_cast %100 : vector<8x32xf32> to vector<1x8x32xf32>
    tpu.vector_store %arg10[%c0_39, %c0_40, %c0_41], %103 {strides = array<i32>} : memref<2x8x32xf32, #tpu.memory_space<vmem>>, vector<1x8x32xf32>,
    %c1 = arith.constant 1 : index
    %c0_42 = arith.constant 0 : index
    %c0_43 = arith.constant 0 : index
    %104 = vector.load %arg10[%c1, %c0_42, %c0_43] : memref<2x8x32xf32, #tpu.memory_space<vmem>>, vector<1x8x32xf32>
    %105 = vector.shape_cast %104 : vector<1x8x32xf32> to vector<8x32xf32>
    %106 = arith.truncf %105 : vector<8x32xf32> to vector<8x32xbf16>
    %cst_44 = arith.constant dense<0.000000e+00> : vector<8x64xf32>
    %107 = tpu.matmul %106, %18, %cst_44 {dimension_numbers = #tpu.dot_dimension_numbers<[1], [0], [0], [1], [0, 0, 1, 1], [], []>} : vector<8x32xbf16>, vector<32x64xbf16>, vector<8x64xf32> -> vector<8x64xf32>
    %108 = vector.extract_strided_slice %107 {offsets = [0, 0], sizes = [8, 32], strides = [1, 1]} : vector<8x64xf32> to vector<8x32xf32>
    %109 = arith.truncf %108 : vector<8x32xf32> to vector<8x32xbf16>
    %110 = vector.extract_strided_slice %107 {offsets = [0, 32], sizes = [8, 32], strides = [1, 1]} : vector<8x64xf32> to vector<8x32xf32>
    %111 = arith.truncf %110 : vector<8x32xf32> to vector<8x32xbf16>
    %cst_45 = arith.constant dense<0.000000e+00> : vector<8x32xf32>
    %112 = tpu.matmul %16, %109, %cst_45 {dimension_numbers = #tpu.dot_dimension_numbers<[1], [0], [0], [1], [0, 0, 1, 1], [], []>} : vector<8x8xbf16>, vector<8x32xbf16>, vector<8x32xf32> -> vector<8x32xf32>
    %cst_46 = arith.constant dense<0.000000e+00> : vector<8x32xf32>
    %113 = tpu.matmul %17, %111, %cst_46 {dimension_numbers = #tpu.dot_dimension_numbers<[1], [0], [0], [1], [0, 0, 1, 1], [], []>} : vector<8x8xbf16>, vector<8x32xbf16>, vector<8x32xf32> -> vector<8x32xf32>
    %114 = arith.addf %112, %113 : vector<8x32xf32>
    %115 = arith.addf %105, %114 : vector<8x32xf32>
    %cst_47 = arith.constant dense<0.000000e+00> : vector<8xf32>
    %116 = vector.multi_reduction <add>, %115, %cst_47 [1] : vector<8x32xf32> to vector<8xf32>
    %117 = vector.shape_cast %116 : vector<8xf32> to vector<8x1xf32>
    %cst_48 = arith.constant 3.200000e+01 : f32
    %118 = vector.broadcast %cst_48 : f32 to vector<8x1xf32>
    %119 = arith.divf %117, %118 : vector<8x1xf32>
    %120 = vector.broadcast %119 : vector<8x1xf32> to vector<8x32xf32>
    %121 = arith.subf %115, %120 : vector<8x32xf32>
    %122 = vector.broadcast %119 : vector<8x1xf32> to vector<8x32xf32>
    %123 = arith.subf %115, %122 : vector<8x32xf32>
    %124 = arith.mulf %121, %123 : vector<8x32xf32>
    %cst_49 = arith.constant dense<0.000000e+00> : vector<8xf32>
    %125 = vector.multi_reduction <add>, %124, %cst_49 [1] : vector<8x32xf32> to vector<8xf32>
    %126 = vector.shape_cast %125 : vector<8xf32> to vector<8x1xf32>
    %cst_50 = arith.constant 3.200000e+01 : f32
    %127 = vector.broadcast %cst_50 : f32 to vector<8x1xf32>
    %128 = arith.divf %126, %127 : vector<8x1xf32>
    %129 = vector.broadcast %119 : vector<8x1xf32> to vector<8x32xf32>
    %130 = arith.subf %115, %129 : vector<8x32xf32>
    %cst_51 = arith.constant 9.99999996E-13 : f32
    %131 = vector.broadcast %cst_51 : f32 to vector<8x1xf32>
    %132 = arith.addf %128, %131 : vector<8x1xf32>
    %133 = math.rsqrt %132 : vector<8x1xf32>
    %134 = vector.broadcast %133 : vector<8x1xf32> to vector<8x32xf32>
    %135 = arith.mulf %130, %134 : vector<8x32xf32>
    %136 = vector.broadcast %5 : vector<1x32xf32> to vector<8x32xf32>
    %137 = arith.mulf %135, %136 : vector<8x32xf32>
    %138 = vector.broadcast %6 : vector<1x32xf32> to vector<8x32xf32>
    %139 = arith.addf %137, %138 : vector<8x32xf32>
    %140 = arith.truncf %139 : vector<8x32xf32> to vector<8x32xbf16>
    %cst_52 = arith.constant dense<0.000000e+00> : vector<8x128xf32>
    %141 = tpu.matmul %140, %13, %cst_52 {dimension_numbers = #tpu.dot_dimension_numbers<[1], [0], [0], [1], [0, 0, 1, 1], [], []>} : vector<8x32xbf16>, vector<32x128xbf16>, vector<8x128xf32> -> vector<8x128xf32>
    %142 = vector.broadcast %11 : vector<1x128xf32> to vector<8x128xf32>
    %143 = arith.addf %141, %142 : vector<8x128xf32>
    %cst_53 = arith.constant 5.000000e-01 : f32
    %144 = vector.broadcast %cst_53 : f32 to vector<8x128xf32>
    %145 = arith.mulf %144, %143 : vector<8x128xf32>
    %cst_54 = arith.constant 4.471500e-02 : f32
    %146 = vector.broadcast %cst_54 : f32 to vector<8x128xf32>
    %147 = arith.mulf %146, %143 : vector<8x128xf32>
    %148 = arith.mulf %147, %143 : vector<8x128xf32>
    %149 = arith.mulf %148, %143 : vector<8x128xf32>
    %150 = arith.addf %143, %149 : vector<8x128xf32>
    %cst_55 = arith.constant 0.797884583 : f32
    %151 = vector.broadcast %cst_55 : f32 to vector<8x128xf32>
    %152 = arith.mulf %151, %150 : vector<8x128xf32>
    %153 = math.tanh %152 : vector<8x128xf32>
    %cst_56 = arith.constant 1.000000e+00 : f32
    %154 = vector.broadcast %cst_56 : f32 to vector<8x128xf32>
    %155 = arith.addf %154, %153 : vector<8x128xf32>
    %156 = arith.mulf %145, %155 : vector<8x128xf32>
    %157 = arith.truncf %156 : vector<8x128xf32> to vector<8x128xbf16>
    %cst_57 = arith.constant dense<0.000000e+00> : vector<8x32xf32>
    %158 = tpu.matmul %157, %15, %cst_57 {dimension_numbers = #tpu.dot_dimension_numbers<[1], [0], [0], [1], [0, 0, 1, 1], [], []>} : vector<8x128xbf16>, vector<128x32xbf16>, vector<8x32xf32> -> vector<8x32xf32>
    %159 = vector.broadcast %9 : vector<1x32xf32> to vector<8x32xf32>
    %160 = arith.addf %158, %159 : vector<8x32xf32>
    %161 = arith.addf %160, %139 : vector<8x32xf32>
    %cst_58 = arith.constant dense<0.000000e+00> : vector<8xf32>
    %162 = vector.multi_reduction <add>, %161, %cst_58 [1] : vector<8x32xf32> to vector<8xf32>
    %163 = vector.shape_cast %162 : vector<8xf32> to vector<8x1xf32>
    %cst_59 = arith.constant 3.200000e+01 : f32
    %164 = vector.broadcast %cst_59 : f32 to vector<8x1xf32>
    %165 = arith.divf %163, %164 : vector<8x1xf32>
    %166 = vector.broadcast %165 : vector<8x1xf32> to vector<8x32xf32>
    %167 = arith.subf %161, %166 : vector<8x32xf32>
    %168 = vector.broadcast %165 : vector<8x1xf32> to vector<8x32xf32>
    %169 = arith.subf %161, %168 : vector<8x32xf32>
    %170 = arith.mulf %167, %169 : vector<8x32xf32>
    %cst_60 = arith.constant dense<0.000000e+00> : vector<8xf32>
    %171 = vector.multi_reduction <add>, %170, %cst_60 [1] : vector<8x32xf32> to vector<8xf32>
    %172 = vector.shape_cast %171 : vector<8xf32> to vector<8x1xf32>
    %cst_61 = arith.constant 3.200000e+01 : f32
    %173 = vector.broadcast %cst_61 : f32 to vector<8x1xf32>
    %174 = arith.divf %172, %173 : vector<8x1xf32>
    %175 = vector.broadcast %165 : vector<8x1xf32> to vector<8x32xf32>
    %176 = arith.subf %161, %175 : vector<8x32xf32>
    %cst_62 = arith.constant 9.99999996E-13 : f32
    %177 = vector.broadcast %cst_62 : f32 to vector<8x1xf32>
    %178 = arith.addf %174, %177 : vector<8x1xf32>
    %179 = math.rsqrt %178 : vector<8x1xf32>
    %180 = vector.broadcast %179 : vector<8x1xf32> to vector<8x32xf32>
    %181 = arith.mulf %176, %180 : vector<8x32xf32>
    %182 = vector.broadcast %7 : vector<1x32xf32> to vector<8x32xf32>
    %183 = arith.mulf %181, %182 : vector<8x32xf32>
    %184 = vector.broadcast %8 : vector<1x32xf32> to vector<8x32xf32>
    %185 = arith.addf %183, %184 : vector<8x32xf32>
    %c1_63 = arith.constant 1 : index
    %c0_64 = arith.constant 0 : index
    %c0_65 = arith.constant 0 : index
    %186 = vector.load %arg10[%c1_63, %c0_64, %c0_65] : memref<2x8x32xf32, #tpu.memory_space<vmem>>, vector<1x8x32xf32>
    %187 = vector.shape_cast %186 : vector<1x8x32xf32> to vector<8x32xf32>
    %188 = vector.shape_cast %185 : vector<8x32xf32> to vector<1x8x32xf32>
    tpu.vector_store %arg10[%c1_63, %c0_64, %c0_65], %188 {strides = array<i32>} : memref<2x8x32xf32, #tpu.memory_space<vmem>>, vector<1x8x32xf32>,
    return
  }
  func.func @transform_0(%arg0: i32, %arg1: i32) -> (i32, i32, i32) {
    %c0_i32 = arith.constant 0 : i32
    %c0_i32_0 = arith.constant 0 : i32
    %c0_i32_1 = arith.constant 0 : i32
    return %arg0, %c0_i32, %c0_i32_0 : i32, i32, i32
  }
  func.func @transform_1(%arg0: i32, %arg1: i32) -> (i32, i32) {
    %c0_i32 = arith.constant 0 : i32
    %c0_i32_0 = arith.constant 0 : i32
    %c0_i32_1 = arith.constant 0 : i32
    return %c0_i32, %c0_i32_0 : i32, i32
  }
  func.func @transform_2(%arg0: i32, %arg1: i32) -> (i32, i32) {
    %c0_i32 = arith.constant 0 : i32
    %c0_i32_0 = arith.constant 0 : i32
    %c0_i32_1 = arith.constant 0 : i32
    return %c0_i32, %c0_i32_0 : i32, i32
  }
  func.func @transform_3(%arg0: i32, %arg1: i32) -> (i32, i32) {
    %c0_i32 = arith.constant 0 : i32
    %c0_i32_0 = arith.constant 0 : i32
    %c0_i32_1 = arith.constant 0 : i32
    return %c0_i32, %c0_i32_0 : i32, i32
  }
  func.func @transform_4(%arg0: i32, %arg1: i32) -> (i32, i32, i32) {
    %c0_i32 = arith.constant 0 : i32
    %c0_i32_0 = arith.constant 0 : i32
    %c0_i32_1 = arith.constant 0 : i32
    return %arg1, %c0_i32, %c0_i32_0 : i32, i32, i32
  }
  func.func @transform_5(%arg0: i32, %arg1: i32) -> (i32, i32, i32) {
    %c0_i32 = arith.constant 0 : i32
    %c0_i32_0 = arith.constant 0 : i32
    %c0_i32_1 = arith.constant 0 : i32
    return %arg1, %c0_i32, %c0_i32_0 : i32, i32, i32
  }
  func.func @transform_6(%arg0: i32, %arg1: i32) -> (i32, i32, i32) {
    %c0_i32 = arith.constant 0 : i32
    %c0_i32_0 = arith.constant 0 : i32
    %c0_i32_1 = arith.constant 0 : i32
    return %arg1, %c0_i32, %c0_i32_0 : i32, i32, i32
  }
  func.func @transform_7(%arg0: i32, %arg1: i32) -> (i32, i32, i32) {
    %c0_i32 = arith.constant 0 : i32
    %c0_i32_0 = arith.constant 0 : i32
    %c0_i32_1 = arith.constant 0 : i32
    return %arg1, %c0_i32, %c0_i32_0 : i32, i32, i32
  }
  func.func @transform_8(%arg0: i32, %arg1: i32) -> (i32, i32, i32) {
    %c0_i32 = arith.constant 0 : i32
    %c0_i32_0 = arith.constant 0 : i32
    %c0_i32_1 = arith.constant 0 : i32
    return %arg0, %c0_i32, %c0_i32_0 : i32, i32, i32
  }
}

</mosaic_0001>

<llo_original>
// kernel: tpu_custom_call.1
$region0: #{tpu_custom_call.1}
  #allocation0 [shape = 'u32[]', space=smem, size = 0x4, offset = 0x4, fixed_abs, tag = 'smem constant byte address 0x4 - core index']
  #allocation1 [shape = 'u32[144,128]{1,0:T(1,128)}', space=vmem, size = 0x12000, scoped, tag = 'internal scratch']
  %s0 = inlined_call_operand.vmem [shape: f32[2,8,32], index: 0, kind: input, shape index: {}]
  %s1 = inlined_call_operand.vmem [shape: bf16[8,8], index: 1, kind: input, shape index: {}]
  %s2 = inlined_call_operand.vmem [shape: bf16[8,8], index: 2, kind: input, shape index: {}]
  %s3 = inlined_call_operand.vmem [shape: bf16[32,64], index: 3, kind: input, shape index: {}]
  %s4 = inlined_call_operand.vmem [shape: f32[2,5,32], index: 4, kind: input, shape index: {}]
  %s5 = inlined_call_operand.vmem [shape: f32[2,1,128], index: 5, kind: input, shape index: {}]
  %s6 = inlined_call_operand.vmem [shape: bf16[2,32,128], index: 6, kind: input, shape index: {}]
  %s7 = inlined_call_operand.vmem [shape: bf16[2,128,32], index: 7, kind: input, shape index: {}]
  %s8 = inlined_call_operand.hbm [shape: f32[2,8,32], index: 8, kind: output, shape index: {}]
  %s9 = sld [smem:[#allocation0]]
  $region69: #{tpu_custom_call.1} parent=0
    _
  %s11 = ssub.s32 1, %s9
  %s12 = scalar_select 0, %s11, %s9
  $region1: #{tpu_custom_call.1} parent=0
    #allocation2 [shape = 'u8[8192]{0}', space=vmem, size = 0x2000, scoped, tag = 'output window, operand 0, single buffered']
    #allocation3 [shape = 's32[2]{0}', space=sflag, size = 0x8, scoped, tag = 'scoped memory for tpu_custom_call.1']
    %13 = vsyncpa [#allocation3], 0
    loop: start=0, step=1, limit=4
    $region2: #{tpu_custom_call.1} parent=1 // loop_pre_header
      _
    $region3: #{tpu_custom_call.1} parent=1 // loop_header
      %s15 = sphi 0, %s19
      %p16 = scmp.ge.s32.totalorder %s15, 4
      %s22 = sphi 0, %s34
      %s23 = sphi 0, %s30
      %s24 = sphi 0, %s22
      %s25 = sphi 0, %s23
      %s26 = sphi 0, %s24
      %s27 = sphi 0, %s25
      %s37 = sphi 0, %s39
      %s40 = sphi 0, %s37
      %s41 = sphi 0, %s40
      %s57 = sphi 0, %s41
      %s61 = sphi 0, %s61
      %s63 = sphi 0, %s61
      %s64 = sphi 0, %s63
      %s78 = sphi 0, %s64
      %s82 = sphi 0, %s82
      %s84 = sphi 0, %s82
      %s85 = sphi 0, %s84
      %s99 = sphi 0, %s85
      %s103 = sphi 0, %s103
      %s105 = sphi 0, %s103
      %s106 = sphi 0, %s105
      %s120 = sphi 0, %s106
      %s126 = sphi 0, %s128
      %s129 = sphi 0, %s126
      %s130 = sphi 0, %s129
      %s146 = sphi 0, %s130
      %s152 = sphi 0, %s154
      %s155 = sphi 0, %s152
      %s156 = sphi 0, %s155
      %s172 = sphi 0, %s156
      %s178 = sphi 0, %s180
      %s181 = sphi 0, %s178
      %s182 = sphi 0, %s181
      %s198 = sphi 0, %s182
      %s204 = sphi 0, %s206
      %s207 = sphi 0, %s204
      %s208 = sphi 0, %s207
      %s224 = sphi 0, %s208
      %s230 = sphi 0, %s232
      %s233 = sphi 0, %s230
      %s234 = sphi 0, %s233
      %s250 = sphi 0, %s234
    $region4: #{tpu_custom_call.1} parent=1 // loop_header_branch
      %18 = sbr.rel (%p16) target = $region8
    $region5: #{tpu_custom_call.1} parent=1 // loop_body
      %s20 = ssub.s32 %s15, 1
      %s21 = ssub.s32 %s15, 2
      %s28 = sadd.s32 1, %s23
      %p29 = scmp.ge.s32.totalorder %s28, 2
      %s30 = scalar_select %p29, 0, %s28
      %s31 = sadd.s32 1, %s22
      %s32 = scalar_select %p29, %s31, %s22
      %p33 = scmp.ge.s32.totalorder %s32, 1
      %s34 = scalar_select %p33, 0, %s32
      %s35 = ssub.s32 %s22, %s34
      %p36 = scmp.eq.s32.totalorder %s35, 0
      %s38 = sadd.s32 %s37, 1
      %s39 = scalar_select %p36, %s37, %s38
      %p42 = pneg %p36
      %p43 = scmp.eq.s32.totalorder %s15, 1
      %p44 = por %p42, %p43
      %p45 = scmp.ne.s32.totalorder %s37, %s40
      %p46 = scmp.eq.s32.totalorder %s15, 0
      %p47 = por %p45, %p46
      %p48 = scmp.ne.s32.totalorder %s37, %s40
      %p49 = scmp.eq.s32.totalorder %s20, 1
      %p50 = por %p48, %p49
      %p51 = scmp.ne.s32.totalorder %s40, %s41
      %p52 = scmp.eq.s32.totalorder %s20, 0
      %p53 = por %p51, %p52
      %p54 = scmp.ne.s32.totalorder %s40, %s41
      %p55 = scmp.eq.s32.totalorder %s21, 1
      %p56 = por %p54, %p55
      %p58 = scmp.ne.s32.totalorder %s41, %s57
      %p59 = scmp.eq.s32.totalorder %s21, 0
      %p60 = por %p58, %p59
      %s62 = sadd.s32 %s61, 1
      %p65 = scmp.eq.s32.totalorder %s15, 1
      %p66 = scmp.ne.s32.totalorder %s61, %s63
      %p67 = scmp.eq.s32.totalorder %s15, 0
      %p68 = por %p66, %p67
      %p69 = scmp.ne.s32.totalorder %s61, %s63
      %p70 = scmp.eq.s32.totalorder %s20, 1
      %p71 = por %p69, %p70
      %p72 = scmp.ne.s32.totalorder %s63, %s64
      %p73 = scmp.eq.s32.totalorder %s20, 0
      %p74 = por %p72, %p73
      %p75 = scmp.ne.s32.totalorder %s63, %s64
      %p76 = scmp.eq.s32.totalorder %s21, 1
      %p77 = por %p75, %p76
      %p79 = scmp.ne.s32.totalorder %s64, %s78
      %p80 = scmp.eq.s32.totalorder %s21, 0
      %p81 = por %p79, %p80
      %s83 = sadd.s32 %s82, 1
      %p86 = scmp.eq.s32.totalorder %s15, 1
      %p87 = scmp.ne.s32.totalorder %s82, %s84
      %p88 = scmp.eq.s32.totalorder %s15, 0
      %p89 = por %p87, %p88
      %p90 = scmp.ne.s32.totalorder %s82, %s84
      %p91 = scmp.eq.s32.totalorder %s20, 1
      %p92 = por %p90, %p91
      %p93 = scmp.ne.s32.totalorder %s84, %s85
      %p94 = scmp.eq.s32.totalorder %s20, 0
      %p95 = por %p93, %p94
      %p96 = scmp.ne.s32.totalorder %s84, %s85
      %p97 = scmp.eq.s32.totalorder %s21, 1
      %p98 = por %p96, %p97
      %p100 = scmp.ne.s32.totalorder %s85, %s99
      %p101 = scmp.eq.s32.totalorder %s21, 0
      %p102 = por %p100, %p101
      %s104 = sadd.s32 %s103, 1
      %p107 = scmp.eq.s32.totalorder %s15, 1
      %p108 = scmp.ne.s32.totalorder %s103, %s105
      %p109 = scmp.eq.s32.totalorder %s15, 0
      %p110 = por %p108, %p109
      %p111 = scmp.ne.s32.totalorder %s103, %s105
      %p112 = scmp.eq.s32.totalorder %s20, 1
      %p113 = por %p111, %p112
      %p114 = scmp.ne.s32.totalorder %s105, %s106
      %p115 = scmp.eq.s32.totalorder %s20, 0
      %p116 = por %p114, %p115
      %p117 = scmp.ne.s32.totalorder %s105, %s106
      %p118 = scmp.eq.s32.totalorder %s21, 1
      %p119 = por %p117, %p118
      %p121 = scmp.ne.s32.totalorder %s106, %s120
      %p122 = scmp.eq.s32.totalorder %s21, 0
      %p123 = por %p121, %p122
      %s124 = ssub.s32 %s23, %s30
      %p125 = scmp.eq.s32.totalorder %s124, 0
      %s127 = sadd.s32 %s126, 1
      %s128 = scalar_select %p125, %s126, %s127
      %p131 = pneg %p125
      %p132 = scmp.eq.s32.totalorder %s15, 1
      %p133 = por %p131, %p132
      %p134 = scmp.ne.s32.totalorder %s126, %s129
      %p135 = scmp.eq.s32.totalorder %s15, 0
      %p136 = por %p134, %p135
      %p137 = scmp.ne.s32.totalorder %s126, %s129
      %p138 = scmp.eq.s32.totalorder %s20, 1
      %p139 = por %p137, %p138
      %p140 = scmp.ne.s32.totalorder %s129, %s130
      %p141 = scmp.eq.s32.totalorder %s20, 0
      %p142 = por %p140, %p141
      %p143 = scmp.ne.s32.totalorder %s129, %s130
      %p144 = scmp.eq.s32.totalorder %s21, 1
      %p145 = por %p143, %p144
      %p147 = scmp.ne.s32.totalorder %s130, %s146
      %p148 = scmp.eq.s32.totalorder %s21, 0
      %p149 = por %p147, %p148
      %s150 = ssub.s32 %s23, %s30
      %p151 = scmp.eq.s32.totalorder %s150, 0
      %s153 = sadd.s32 %s152, 1
      %s154 = scalar_select %p151, %s152, %s153
      %p157 = pneg %p151
      %p158 = scmp.eq.s32.totalorder %s15, 1
      %p159 = por %p157, %p158
      %p160 = scmp.ne.s32.totalorder %s152, %s155
      %p161 = scmp.eq.s32.totalorder %s15, 0
      %p162 = por %p160, %p161
      %p163 = scmp.ne.s32.totalorder %s152, %s155
      %p164 = scmp.eq.s32.totalorder %s20, 1
      %p165 = por %p163, %p164
      %p166 = scmp.ne.s32.totalorder %s155, %s156
      %p167 = scmp.eq.s32.totalorder %s20, 0
      %p168 = por %p166, %p167
      %p169 = scmp.ne.s32.totalorder %s155, %s156
      %p170 = scmp.eq.s32.totalorder %s21, 1
      %p171 = por %p169, %p170
      %p173 = scmp.ne.s32.totalorder %s156, %s172
      %p174 = scmp.eq.s32.totalorder %s21, 0
      %p175 = por %p173, %p174
      %s176 = ssub.s32 %s23, %s30
      %p177 = scmp.eq.s32.totalorder %s176, 0
      %s179 = sadd.s32 %s178, 1
      %s180 = scalar_select %p177, %s178, %s179
      %p183 = pneg %p177
      %p184 = scmp.eq.s32.totalorder %s15, 1
      %p185 = por %p183, %p184
      %p186 = scmp.ne.s32.totalorder %s178, %s181
      %p187 = scmp.eq.s32.totalorder %s15, 0
      %p188 = por %p186, %p187
      %p189 = scmp.ne.s32.totalorder %s178, %s181
      %p190 = scmp.eq.s32.totalorder %s20, 1
      %p191 = por %p189, %p190
      %p192 = scmp.ne.s32.totalorder %s181, %s182
      %p193 = scmp.eq.s32.totalorder %s20, 0
      %p194 = por %p192, %p193
      %p195 = scmp.ne.s32.totalorder %s181, %s182
      %p196 = scmp.eq.s32.totalorder %s21, 1
      %p197 = por %p195, %p196
      %p199 = scmp.ne.s32.totalorder %s182, %s198
      %p200 = scmp.eq.s32.totalorder %s21, 0
      %p201 = por %p199, %p200
      %s202 = ssub.s32 %s23, %s30
      %p203 = scmp.eq.s32.totalorder %s202, 0
      %s205 = sadd.s32 %s204, 1
      %s206 = scalar_select %p203, %s204, %s205
      %p209 = pneg %p203
      %p210 = scmp.eq.s32.totalorder %s15, 1
      %p211 = por %p209, %p210
      %p212 = scmp.ne.s32.totalorder %s204, %s207
      %p213 = scmp.eq.s32.totalorder %s15, 0
      %p214 = por %p212, %p213
      %p215 = scmp.ne.s32.totalorder %s204, %s207
      %p216 = scmp.eq.s32.totalorder %s20, 1
      %p217 = por %p215, %p216
      %p218 = scmp.ne.s32.totalorder %s207, %s208
      %p219 = scmp.eq.s32.totalorder %s20, 0
      %p220 = por %p218, %p219
      %p221 = scmp.ne.s32.totalorder %s207, %s208
      %p222 = scmp.eq.s32.totalorder %s21, 1
      %p223 = por %p221, %p222
      %p225 = scmp.ne.s32.totalorder %s208, %s224
      %p226 = scmp.eq.s32.totalorder %s21, 0
      %p227 = por %p225, %p226
      %s228 = ssub.s32 %s22, %s34
      %p229 = scmp.eq.s32.totalorder %s228, 0
      %s231 = sadd.s32 %s230, 1
      %s232 = scalar_select %p229, %s230, %s231
      %p235 = pneg %p229
      %p236 = scmp.eq.s32.totalorder %s15, 1
      %p237 = por %p235, %p236
      %p238 = scmp.ne.s32.totalorder %s230, %s233
      %p239 = scmp.eq.s32.totalorder %s15, 0
      %p240 = por %p238, %p239
      %p241 = scmp.ne.s32.totalorder %s230, %s233
      %p242 = scmp.eq.s32.totalorder %s20, 1
      %p243 = por %p241, %p242
      %p244 = scmp.ne.s32.totalorder %s233, %s234
      %p245 = scmp.eq.s32.totalorder %s20, 0
      %p246 = por %p244, %p245
      %p247 = scmp.ne.s32.totalorder %s233, %s234
      %p248 = scmp.eq.s32.totalorder %s21, 1
      %p249 = por %p247, %p248
      %p251 = scmp.ne.s32.totalorder %s234, %s250
      %p252 = scmp.eq.s32.totalorder %s21, 0
      %p253 = por %p251, %p252
      %p254 = scmp.le.s32.totalorder 1, %s15
      %p255 = scmp.lt.s32.totalorder %s15, 3
      %p256 = pnand %p254, %p255
      %p257 = pneg %p256
      // Predicated region
      $region9: #{tpu_custom_call.1} parent=5 // pred_check
        _
      $region10: #{tpu_custom_call.1} parent=5 // pred_check_branch
        %259 = sbr.rel (%p256) target = $region12
      $region11: #{tpu_custom_call.1} parent=5 // pred_region
        %s260 = ssub.s32 %s15, 1
        // Predicated region
        $region13: #{tpu_custom_call.1} parent=11 // pred_check
          %p261 = pneg %p53
        $region14: #{tpu_custom_call.1} parent=11 // pred_check_branch
          %263 = sbr.rel (%p261) target = $region16
        $region15: #{tpu_custom_call.1} parent=11 // pred_region
          %s264 = smul.u32 2, %s24
          %p265 = scmp.lt.s32.totalorder %s264, 1
          %s266 = scalar_select %p265, %s264, 1
          %s267 = smul.addr %s266, 8
          %s268 = scalar_lea.vmem %s0, %s267
          %s269 = smul.u32 2, %s24
        $region16: #{tpu_custom_call.1} parent=11 // pred_fallthru
          _
        // Predicated region
        $region17: #{tpu_custom_call.1} parent=11 // pred_check
          %p270 = pneg %p74
        $region18: #{tpu_custom_call.1} parent=11 // pred_check_branch
          %272 = sbr.rel (%p270) target = $region20
        $region19: #{tpu_custom_call.1} parent=11 // pred_region
          _
        $region20: #{tpu_custom_call.1} parent=11 // pred_fallthru
          _
        // Predicated region
        $region21: #{tpu_custom_call.1} parent=11 // pred_check
          %p273 = pneg %p95
        $region22: #{tpu_custom_call.1} parent=11 // pred_check_branch
          %275 = sbr.rel (%p273) target = $region24
        $region23: #{tpu_custom_call.1} parent=11 // pred_region
          _
        $region24: #{tpu_custom_call.1} parent=11 // pred_fallthru
          _
        // Predicated region
        $region25: #{tpu_custom_call.1} parent=11 // pred_check
          %p276 = pneg %p116
        $region26: #{tpu_custom_call.1} parent=11 // pred_check_branch
          %278 = sbr.rel (%p276) target = $region28
        $region27: #{tpu_custom_call.1} parent=11 // pred_region
          _
        $region28: #{tpu_custom_call.1} parent=11 // pred_fallthru
          _
      $region12: #{tpu_custom_call.1} parent=5 // pred_fallthru
        _
      %p279 = scmp.lt.s32.totalorder %s15, 2
      // Predicated region
      $region29: #{tpu_custom_call.1} parent=5 // pred_check
        %p280 = pneg %p279
      $region30: #{tpu_custom_call.1} parent=5 // pred_check_branch
        %282 = sbr.rel (%p280) target = $region32
      $region31: #{tpu_custom_call.1} parent=5 // pred_region
        // Predicated region
        $region33: #{tpu_custom_call.1} parent=31 // pred_check
          %p283 = pneg %p136
        $region34: #{tpu_custom_call.1} parent=31 // pred_check_branch
          %285 = sbr.rel (%p283) target = $region36
        $region35: #{tpu_custom_call.1} parent=31 // pred_region
          %p286 = scmp.lt.s32.totalorder %s23, 1
          %s287 = scalar_select %p286, %s23, 1
          %s288 = smul.addr %s287, 8
          %s289 = scalar_lea.vmem %s4, %s288
        $region36: #{tpu_custom_call.1} parent=31 // pred_fallthru
          _
        // Predicated region
        $region37: #{tpu_custom_call.1} parent=31 // pred_check
          %p290 = pneg %p162
        $region38: #{tpu_custom_call.1} parent=31 // pred_check_branch
          %292 = sbr.rel (%p290) target = $region40
        $region39: #{tpu_custom_call.1} parent=31 // pred_region
          %p293 = scmp.lt.s32.totalorder %s23, 1
          %s294 = scalar_select %p293, %s23, 1
          %s295 = scalar_lea.vmem %s5, %s294
        $region40: #{tpu_custom_call.1} parent=31 // pred_fallthru
          _
        // Predicated region
        $region41: #{tpu_custom_call.1} parent=31 // pred_check
          %p296 = pneg %p188
        $region42: #{tpu_custom_call.1} parent=31 // pred_check_branch
          %298 = sbr.rel (%p296) target = $region44
        $region43: #{tpu_custom_call.1} parent=31 // pred_region
          %p299 = scmp.lt.s32.totalorder %s23, 1
          %s300 = scalar_select %p299, %s23, 1
          %s301 = smul.addr %s300, 4
          %s302 = smul.addr %s301, 4
          %s303 = scalar_lea.vmem %s6, %s302
        $region44: #{tpu_custom_call.1} parent=31 // pred_fallthru
          _
        // Predicated region
        $region45: #{tpu_custom_call.1} parent=31 // pred_check
          %p304 = pneg %p214
        $region46: #{tpu_custom_call.1} parent=31 // pred_check_branch
          %306 = sbr.rel (%p304) target = $region48
        $region47: #{tpu_custom_call.1} parent=31 // pred_region
          %p307 = scmp.lt.s32.totalorder %s23, 1
          %s308 = scalar_select %p307, %s23, 1
          %s309 = smul.addr %s308, 16
          %s310 = smul.addr %s309, 4
          %s311 = scalar_lea.vmem %s7, %s310
        $region48: #{tpu_custom_call.1} parent=31 // pred_fallthru
          _
      $region32: #{tpu_custom_call.1} parent=5 // pred_fallthru
        _
      %p312 = scmp.le.s32.totalorder 1, %s15
      %p313 = scmp.lt.s32.totalorder %s15, 3
      %p314 = pnand %p312, %p313
      %p315 = pneg %p314
      // Predicated region
      $region49: #{tpu_custom_call.1} parent=5 // pred_check
        _
      $region50: #{tpu_custom_call.1} parent=5 // pred_check_branch
        %317 = sbr.rel (%p314) target = $region52
      $region51: #{tpu_custom_call.1} parent=5 // pred_region
        %s318 = ssub.s32 %s15, 1
        %s319 = smul.u32 2, %s24
        %p320 = scmp.lt.s32.totalorder %s319, 1
        %s321 = scalar_select %p320, %s319, 1
        %s322 = smul.addr %s321, 8
        %s323 = scalar_lea.vmem %s0, %s322
        %p324 = pneg %p53
        %p325 = pneg %p50
        %p326 = pneg %p74
        %p327 = pneg %p71
        %p328 = pneg %p95
        %p329 = pneg %p92
        %p330 = pneg %p116
        %p331 = pneg %p113
        %p332 = scmp.lt.s32.totalorder %s25, 1
        %s333 = scalar_select %p332, %s25, 1
        %s334 = smul.addr %s333, 8
        %s335 = scalar_lea.vmem %s4, %s334
        %p336 = pneg %p142
        %p337 = pneg %p139
        %p338 = scmp.lt.s32.totalorder %s25, 1
        %s339 = scalar_select %p338, %s25, 1
        %s340 = scalar_lea.vmem %s5, %s339
        %p341 = pneg %p168
        %p342 = pneg %p165
        %p343 = scmp.lt.s32.totalorder %s25, 1
        %s344 = scalar_select %p343, %s25, 1
        %s345 = smul.addr %s344, 4
        %s346 = smul.addr %s345, 4
        %s347 = scalar_lea.vmem %s6, %s346
        %p348 = pneg %p194
        %p349 = pneg %p191
        %p350 = scmp.lt.s32.totalorder %s25, 1
        %s351 = scalar_select %p350, %s25, 1
        %s352 = smul.addr %s351, 16
        %s353 = smul.addr %s352, 4
        %s354 = scalar_lea.vmem %s7, %s353
        %p355 = pneg %p220
        %p356 = pneg %p217
        %p357 = pneg %p246
        %p358 = pneg %p243
        %s359 = smul.u32 2, %s24
        %p360 = scmp.lt.s32.totalorder %s359, 1
        %s361 = scalar_select %p360, %s359, 1
        %s362 = smul.addr %s361, 8
        %s363 = scalar_lea.vmem %s0, %s362
        %s364 = smul.u32 2, %s24
        %p365 = scmp.lt.s32.totalorder %s25, 1
        %s366 = scalar_select %p365, %s25, 1
        %s367 = smul.addr %s366, 8
        %s368 = scalar_lea.vmem %s4, %s367
        %p369 = scmp.lt.s32.totalorder %s25, 1
        %s370 = scalar_select %p369, %s25, 1
        %s371 = scalar_lea.vmem %s5, %s370
        %p372 = scmp.lt.s32.totalorder %s25, 1
        %s373 = scalar_select %p372, %s25, 1
        %s374 = smul.addr %s373, 4
        %s375 = smul.addr %s374, 4
        %s376 = scalar_lea.vmem %s6, %s375
        %p377 = scmp.lt.s32.totalorder %s25, 1
        %s378 = scalar_select %p377, %s25, 1
        %s379 = smul.addr %s378, 16
        %s380 = smul.addr %s379, 4
        %s381 = scalar_lea.vmem %s7, %s380
        %s382 = smul.u32 2, %s24
        %p384 = scmp.eq.s32.totalorder %s25, 0
        // Predicated region
        $region53: #{tpu_custom_call.1} parent=51 // pred_check
          %p385 = pneg %p384
        $region54: #{tpu_custom_call.1} parent=51 // pred_check_branch
          %387 = sbr.rel (%p385) target = $region56
        $region55: #{tpu_custom_call.1} parent=51 // pred_region
          %v388 = vld [vmem:[%s363] sm:$0xff]
          %v389 = vld [vmem:[%s363 + $0x8] sm:$0xff]
          %vm390 = vcmask 261120
          %391 = vst.msk [vmem:[#allocation2] sm:$0xff] %vm390, %v388
          %392 = vst.msk [vmem:[#allocation2 + $0x8] sm:$0xff] %vm390, %v389
        $region56: #{tpu_custom_call.1} parent=51 // pred_fallthru
          _
        %v393 = vld [vmem:[%s368] sm:$0x1f]
        %v394 = vld [vmem:[%s371] sm:$0x1]
        %v395 = vld [vmem:[%s376] sm:$0xf]
        %v396 = vld [vmem:[%s376 + $0x4] sm:$0xf]
        %v397 = vld [vmem:[%s376 + $0x8] sm:$0xf]
        %v398 = vld [vmem:[%s376 + $0xc] sm:$0xf]
        %v399 = vld [vmem:[%s381] sm:$0xf]
        %v400 = vld [vmem:[%s381 + $0x4] sm:$0xf]
        %v401 = vld [vmem:[%s381 + $0x8] sm:$0xf]
        %v402 = vld [vmem:[%s381 + $0xc] sm:$0xf]
        %v403 = vld [vmem:[%s381 + $0x10] sm:$0xf]
        %v404 = vld [vmem:[%s381 + $0x14] sm:$0xf]
        %v405 = vld [vmem:[%s381 + $0x18] sm:$0xf]
        %v406 = vld [vmem:[%s381 + $0x1c] sm:$0xf]
        %v407 = vld [vmem:[%s381 + $0x20] sm:$0xf]
        %v408 = vld [vmem:[%s381 + $0x24] sm:$0xf]
        %v409 = vld [vmem:[%s381 + $0x28] sm:$0xf]
        %v410 = vld [vmem:[%s381 + $0x2c] sm:$0xf]
        %v411 = vld [vmem:[%s381 + $0x30] sm:$0xf]
        %v412 = vld [vmem:[%s381 + $0x34] sm:$0xf]
        %v413 = vld [vmem:[%s381 + $0x38] sm:$0xf]
        %v414 = vld [vmem:[%s381 + $0x3c] sm:$0xf]
        %v415 = vld [vmem:[%s1] sm:$0xf]
        %v416 = vld [vmem:[%s2] sm:$0xf]
        %v417 = vld [vmem:[%s3] sm:$0xf]
        %v418 = vld [vmem:[%s3 + $0x4] sm:$0xf]
        %v419 = vld [vmem:[%s3 + $0x8] sm:$0xf]
        %v420 = vld [vmem:[%s3 + $0xc] sm:$0xf]
        %v421 = vld [vmem:[#allocation2] sm:$0xff]
        %v422 = vpack.c.bf16 %v421, %v421
        %v427 = vunpack.c.l.b16 %v417
        %v428 = vunpack.c.l.b16 %v418
        %v429 = vunpack.c.l.b16 %v419
        %v430 = vunpack.c.l.b16 %v420
        %v431 = vpack.c.b16 %v428, %v427
        %v432 = vpack.c.b16 %v430, %v429
        %vm435 = vcmask 261120
        %v437 = vsel %vm435, %v422, 0
        %439 = vmatprep.subr.bf16.mxu0 0
        %440 = vmatpush1.bf16.msra.mxu0 %v431
        %441 = vmatprep.subr.bf16.mxu0 0
        %442 = vmatpush1.bf16.msra.mxu0 %v432
        %443 = vmatprep.subr.bf16.mxu0 0
        %444 = vmatpush1.bf16.msra.mxu0 0
        %445 = vmatprep.subr.bf16.mxu0 0
        %446 = vmatpush1.bf16.msra.mxu0 0
        %447 = vmatprep.subr.bf16.mxu0 0
        %448 = vmatpush1.bf16.msra.mxu0 0
        %449 = vmatprep.subr.bf16.mxu0 0
        %450 = vmatpush1.bf16.msra.mxu0 0
        %451 = vmatprep.subr.bf16.mxu0 0
        %452 = vmatpush1.bf16.msra.mxu0 0
        %453 = vmatprep.subr.bf16.mxu0 0
        %454 = vmatpush1.bf16.msra.mxu0 0
        %455 = vmatprep.subr.bf16.mxu0 0
        %456 = vmatpush1.bf16.msra.mxu0 0
        %457 = vmatprep.subr.bf16.mxu0 0
        %458 = vmatpush1.bf16.msra.mxu0 0
        %459 = vmatprep.subr.bf16.mxu0 0
        %460 = vmatpush1.bf16.msra.mxu0 0
        %461 = vmatprep.subr.bf16.mxu0 0
        %462 = vmatpush1.bf16.msra.mxu0 0
        %463 = vmatprep.subr.bf16.mxu0 0
        %464 = vmatpush1.bf16.msra.mxu0 0
        %465 = vmatprep.subr.bf16.mxu0 0
        %466 = vmatpush1.bf16.msra.mxu0 0
        %467 = vmatprep.subr.bf16.mxu0 0
        %468 = vmatpush1.bf16.msra.mxu0 0
        %469 = vmatprep.subr.bf16.mxu0 0
        %470 = vmatpush1.bf16.msra.mxu0 0
        %471 = vmatprep.mubr.bf16.mxu0 0
        %472 = vmatmul.mubr.bf16.gmra.mrb[0].mxu0 %v437
        %v473 = vpop.f32.mrb[0].mxu0
        %v474 = vadd.f32 0.0, %v473
        %v475 = vpop.f32.mrb[0].mxu0
        %v476 = vpop.f32.mrb[0].mxu0
        %v477 = vpop.f32.mrb[0].mxu0
        %478 = vdwg.mxu0
        %v479 = vpack.c.bf16 %v474, %v474
        %481 = vrot.lane.b32.xlu0 %v479, 96
        %v482 = vpop.permute.xlu0 %481
        %vm483 = vcmask 64512
        %v485 = vsel %vm483, %v416, 0
        %vm487 = vcmask 1043456
        %v489 = vsel %vm487, %v482, 0
        %491 = vmatprep.subr.bf16.mxu0 0
        %492 = vmatpush1.bf16.msra.mxu0 %v489
        %493 = vmatprep.subr.bf16.mxu0 0
        %494 = vmatpush1.bf16.msra.mxu0 0
        %495 = vmatprep.subr.bf16.mxu0 0
        %496 = vmatpush1.bf16.msra.mxu0 0
        %497 = vmatprep.subr.bf16.mxu0 0
        %498 = vmatpush1.bf16.msra.mxu0 0
        %499 = vmatprep.subr.bf16.mxu0 0
        %500 = vmatpush1.bf16.msra.mxu0 0
        %501 = vmatprep.subr.bf16.mxu0 0
        %502 = vmatpush1.bf16.msra.mxu0 0
        %503 = vmatprep.subr.bf16.mxu0 0
        %504 = vmatpush1.bf16.msra.mxu0 0
        %505 = vmatprep.subr.bf16.mxu0 0
        %506 = vmatpush1.bf16.msra.mxu0 0
        %507 = vmatprep.subr.bf16.mxu0 0
        %508 = vmatpush1.bf16.msra.mxu0 0
        %509 = vmatprep.subr.bf16.mxu0 0
        %510 = vmatpush1.bf16.msra.mxu0 0
        %511 = vmatprep.subr.bf16.mxu0 0
        %512 = vmatpush1.bf16.msra.mxu0 0
        %513 = vmatprep.subr.bf16.mxu0 0
        %514 = vmatpush1.bf16.msra.mxu0 0
        %515 = vmatprep.subr.bf16.mxu0 0
        %516 = vmatpush1.bf16.msra.mxu0 0
        %517 = vmatprep.subr.bf16.mxu0 0
        %518 = vmatpush1.bf16.msra.mxu0 0
        %519 = vmatprep.subr.bf16.mxu0 0
        %520 = vmatpush1.bf16.msra.mxu0 0
        %521 = vmatprep.subr.bf16.mxu0 0
        %522 = vmatpush1.bf16.msra.mxu0 0
        %523 = vmatprep.mubr.bf16.mxu0 0
        %524 = vmatmul.mubr.bf16.gmra.mrb[0].mxu0 %v485
        %v525 = vpop.f32.mrb[0].mxu0
        %v526 = vadd.f32 0.0, %v525
        %v527 = vpop.f32.mrb[0].mxu0
        %v528 = vpop.f32.mrb[0].mxu0
        %v529 = vpop.f32.mrb[0].mxu0
        %530 = vdwg.mxu0
        %v532 = vsel %vm483, %v415, 0
        %v535 = vsel %vm487, %v479, 0
        %537 = vmatprep.subr.bf16.mxu0 0
        %538 = vmatpush1.bf16.msra.mxu0 %v535
        %539 = vmatprep.subr.bf16.mxu0 0
        %540 = vmatpush1.bf16.msra.mxu0 0
        %541 = vmatprep.subr.bf16.mxu0 0
        %542 = vmatpush1.bf16.msra.mxu0 0
        %543 = vmatprep.subr.bf16.mxu0 0
        %544 = vmatpush1.bf16.msra.mxu0 0
        %545 = vmatprep.subr.bf16.mxu0 0
        %546 = vmatpush1.bf16.msra.mxu0 0
        %547 = vmatprep.subr.bf16.mxu0 0
        %548 = vmatpush1.bf16.msra.mxu0 0
        %549 = vmatprep.subr.bf16.mxu0 0
        %550 = vmatpush1.bf16.msra.mxu0 0
        %551 = vmatprep.subr.bf16.mxu0 0
        %552 = vmatpush1.bf16.msra.mxu0 0
        %553 = vmatprep.subr.bf16.mxu0 0
        %554 = vmatpush1.bf16.msra.mxu0 0
        %555 = vmatprep.subr.bf16.mxu0 0
        %556 = vmatpush1.bf16.msra.mxu0 0
        %557 = vmatprep.subr.bf16.mxu0 0
        %558 = vmatpush1.bf16.msra.mxu0 0
        %559 = vmatprep.subr.bf16.mxu0 0
        %560 = vmatpush1.bf16.msra.mxu0 0
        %561 = vmatprep.subr.bf16.mxu0 0
        %562 = vmatpush1.bf16.msra.mxu0 0
        %563 = vmatprep.subr.bf16.mxu0 0
        %564 = vmatpush1.bf16.msra.mxu0 0
        %565 = vmatprep.subr.bf16.mxu0 0
        %566 = vmatpush1.bf16.msra.mxu0 0
        %567 = vmatprep.subr.bf16.mxu0 0
        %568 = vmatpush1.bf16.msra.mxu0 0
        %569 = vmatprep.mubr.bf16.mxu0 0
        %570 = vmatmul.mubr.bf16.gmra.mrb[0].mxu0 %v532
        %v571 = vpop.f32.mrb[0].mxu0
        %v572 = vadd.f32 %v526, %v571
        %v573 = vpop.f32.mrb[0].mxu0
        %v574 = vpop.f32.mrb[0].mxu0
        %v575 = vpop.f32.mrb[0].mxu0
        %576 = vdwg.mxu0
        %v577 = vadd.f32 %v421, %v572
        %v578 = vsel %vm435, %v577, 0.0
        %579 = vadd.xlane.f32.xlu0 %v578
        %v580 = vpop.xlane.xlu0 %579
        %v581 = vrcp.pop 32.0
        %v582 = vmul.f32 %v580, %v581
        %v583 = vsub.f32 %v577, %v582
        %v584 = vmul.f32 %v583, %v583
        %v585 = vsel %vm435, %v584, 0.0
        %586 = vadd.xlane.f32.xlu0 %v585
        %v587 = vpop.xlane.xlu0 %586
        %v588 = vmul.f32 %v587, %v581
        %v589 = vadd.f32 %v588, 1e-12
        %v590 = vrsqrt.pop %v589
        %v591 = vmul.f32 %v583, %v590
        %v592 = vlaneseq
        %v593 = vshrl.u32 %v592, 7
        %v594 = vsub.s32 0, %v593
        %v595 = vrot.slane %v393, %v594
        %v596 = vmul.f32 %v591, %v595
        %v597 = vlaneseq
        %v598 = vshrl.u32 %v597, 7
        %v599 = vsub.s32 1, %v598
        %v600 = vrot.slane %v393, %v599
        %v601 = vadd.f32 %v596, %v600
        %v602 = vpack.c.bf16 %v601, %v601
        %v604 = vlaneseq
        %v605 = vshrl.u32 %v604, 7
        %v606 = vsub.s32 0, %v605
        %v607 = vrot.slane %v394, %v606
        %v613 = vunpack.c.l.b16 %v395
        %v614 = vunpack.c.l.b16 %v396
        %v615 = vunpack.c.l.b16 %v397
        %v616 = vunpack.c.l.b16 %v398
        %v617 = vpack.c.b16 %v614, %v613
        %v618 = vpack.c.b16 %v616, %v615
        %v622 = vsel %vm435, %v602, 0
        %624 = vmatprep.subr.bf16.mxu0 0
        %625 = vmatpush1.bf16.msra.mxu0 %v617
        %626 = vmatprep.subr.bf16.mxu0 0
        %627 = vmatpush1.bf16.msra.mxu0 %v618
        %628 = vmatprep.subr.bf16.mxu0 0
        %629 = vmatpush1.bf16.msra.mxu0 0
        %630 = vmatprep.subr.bf16.mxu0 0
        %631 = vmatpush1.bf16.msra.mxu0 0
        %632 = vmatprep.subr.bf16.mxu0 0
        %633 = vmatpush1.bf16.msra.mxu0 0
        %634 = vmatprep.subr.bf16.mxu0 0
        %635 = vmatpush1.bf16.msra.mxu0 0
        %636 = vmatprep.subr.bf16.mxu0 0
        %637 = vmatpush1.bf16.msra.mxu0 0
        %638 = vmatprep.subr.bf16.mxu0 0
        %639 = vmatpush1.bf16.msra.mxu0 0
        %640 = vmatprep.subr.bf16.mxu0 0
        %641 = vmatpush1.bf16.msra.mxu0 0
        %642 = vmatprep.subr.bf16.mxu0 0
        %643 = vmatpush1.bf16.msra.mxu0 0
        %644 = vmatprep.subr.bf16.mxu0 0
        %645 = vmatpush1.bf16.msra.mxu0 0
        %646 = vmatprep.subr.bf16.mxu0 0
        %647 = vmatpush1.bf16.msra.mxu0 0
        %648 = vmatprep.subr.bf16.mxu0 0
        %649 = vmatpush1.bf16.msra.mxu0 0
        %650 = vmatprep.subr.bf16.mxu0 0
        %651 = vmatpush1.bf16.msra.mxu0 0
        %652 = vmatprep.subr.bf16.mxu0 0
        %653 = vmatpush1.bf16.msra.mxu0 0
        %654 = vmatprep.subr.bf16.mxu0 0
        %655 = vmatpush1.bf16.msra.mxu0 0
        %656 = vmatprep.mubr.bf16.mxu0 0
        %657 = vmatmul.mubr.bf16.gmra.mrb[0].mxu0 %v622
        %v658 = vpop.f32.mrb[0].mxu0
        %v659 = vadd.f32 %v607, %v658
        %v660 = vpop.f32.mrb[0].mxu0
        %v661 = vpop.f32.mrb[0].mxu0
        %v662 = vpop.f32.mrb[0].mxu0
        %663 = vdwg.mxu0
        %v664 = vmul.f32 %v659, 0.5
        %v665 = vmul.f32 %v659, 0.044715
        %v666 = vmul.f32 %v665, %v659
        %v667 = vmul.f32 %v666, %v659
        %v668 = vadd.f32 %v659, %v667
        %v669 = vmul.f32 %v668, 0.7978846
        %v670 = vtanh.pop %v669
        %v671 = vadd.f32 %v670, 1.0
        %v672 = vmul.f32 %v664, %v671
        %v673 = vpack.c.bf16 %v672, %v672
        %v674 = vlaneseq
        %v675 = vshrl.u32 %v674, 7
        %v676 = vsub.s32 4, %v675
        %v677 = vrot.slane %v393, %v676
        %v694 = vunpack.c.l.b16 %v399
        %v695 = vunpack.c.l.b16 %v400
        %v696 = vunpack.c.l.b16 %v401
        %v697 = vunpack.c.l.b16 %v402
        %v698 = vunpack.c.l.b16 %v403
        %v699 = vunpack.c.l.b16 %v404
        %v700 = vunpack.c.l.b16 %v405
        %v701 = vunpack.c.l.b16 %v406
        %v702 = vunpack.c.l.b16 %v407
        %v703 = vunpack.c.l.b16 %v408
        %v704 = vunpack.c.l.b16 %v409
        %v705 = vunpack.c.l.b16 %v410
        %v706 = vunpack.c.l.b16 %v411
        %v707 = vunpack.c.l.b16 %v412
        %v708 = vunpack.c.l.b16 %v413
        %v709 = vunpack.c.l.b16 %v414
        %v710 = vpack.c.b16 %v695, %v694
        %v711 = vpack.c.b16 %v697, %v696
        %v712 = vpack.c.b16 %v699, %v698
        %v713 = vpack.c.b16 %v701, %v700
        %v714 = vpack.c.b16 %v703, %v702
        %v715 = vpack.c.b16 %v705, %v704
        %v716 = vpack.c.b16 %v707, %v706
        %v717 = vpack.c.b16 %v709, %v708
        %726 = vmatprep.subr.bf16.mxu0 0
        %727 = vmatpush1.bf16.msra.mxu0 %v710
        %728 = vmatprep.subr.bf16.mxu0 0
        %729 = vmatpush1.bf16.msra.mxu0 %v711
        %730 = vmatprep.subr.bf16.mxu0 0
        %731 = vmatpush1.bf16.msra.mxu0 %v712
        %732 = vmatprep.subr.bf16.mxu0 0
        %733 = vmatpush1.bf16.msra.mxu0 %v713
        %734 = vmatprep.subr.bf16.mxu0 0
        %735 = vmatpush1.bf16.msra.mxu0 %v714
        %736 = vmatprep.subr.bf16.mxu0 0
        %737 = vmatpush1.bf16.msra.mxu0 %v715
        %738 = vmatprep.subr.bf16.mxu0 0
        %739 = vmatpush1.bf16.msra.mxu0 %v716
        %740 = vmatprep.subr.bf16.mxu0 0
        %741 = vmatpush1.bf16.msra.mxu0 %v717
        %742 = vmatprep.subr.bf16.mxu0 0
        %743 = vmatpush1.bf16.msra.mxu0 0
        %744 = vmatprep.subr.bf16.mxu0 0
        %745 = vmatpush1.bf16.msra.mxu0 0
        %746 = vmatprep.subr.bf16.mxu0 0
        %747 = vmatpush1.bf16.msra.mxu0 0
        %748 = vmatprep.subr.bf16.mxu0 0
        %749 = vmatpush1.bf16.msra.mxu0 0
        %750 = vmatprep.subr.bf16.mxu0 0
        %751 = vmatpush1.bf16.msra.mxu0 0
        %752 = vmatprep.subr.bf16.mxu0 0
        %753 = vmatpush1.bf16.msra.mxu0 0
        %754 = vmatprep.subr.bf16.mxu0 0
        %755 = vmatpush1.bf16.msra.mxu0 0
        %756 = vmatprep.subr.bf16.mxu0 0
        %757 = vmatpush1.bf16.msra.mxu0 0
        %758 = vmatprep.mubr.bf16.mxu0 0
        %759 = vmatmul.mubr.bf16.gmra.mrb[0].mxu0 %v673
        %v760 = vpop.f32.mrb[0].mxu0
        %v761 = vadd.f32 %v677, %v760
        %v762 = vpop.f32.mrb[0].mxu0
        %v763 = vpop.f32.mrb[0].mxu0
        %v764 = vpop.f32.mrb[0].mxu0
        %765 = vdwg.mxu0
        %v766 = vadd.f32 %v761, %v601
        %v767 = vsel %vm435, %v766, 0.0
        %768 = vadd.xlane.f32.xlu0 %v767
        %v769 = vpop.xlane.xlu0 %768
        %v770 = vmul.f32 %v769, %v581
        %v771 = vsub.f32 %v766, %v770
        %v772 = vmul.f32 %v771, %v771
        %v773 = vsel %vm435, %v772, 0.0
        %774 = vadd.xlane.f32.xlu0 %v773
        %v775 = vpop.xlane.xlu0 %774
        %v776 = vmul.f32 %v775, %v581
        %v777 = vadd.f32 %v776, 1e-12
        %v778 = vrsqrt.pop %v777
        %v779 = vmul.f32 %v771, %v778
        %v780 = vlaneseq
        %v781 = vshrl.u32 %v780, 7
        %v782 = vsub.s32 2, %v781
        %v783 = vrot.slane %v393, %v782
        %v784 = vmul.f32 %v779, %v783
        %v785 = vlaneseq
        %v786 = vshrl.u32 %v785, 7
        %v787 = vsub.s32 3, %v786
        %v788 = vrot.slane %v393, %v787
        %v789 = vadd.f32 %v784, %v788
        %790 = vst.msk [vmem:[#allocation2] sm:$0xff] %vm435, %v789
        %s791 = scalar_lea.vmem [#allocation2], 8
        %v792 = vld [vmem:[%s791] sm:$0xff]
        %v793 = vpack.c.bf16 %v792, %v792
        %v795 = vsel %vm435, %v793, 0
        %797 = vmatprep.subr.bf16.mxu0 0
        %798 = vmatpush1.bf16.msra.mxu0 %v431
        %799 = vmatprep.subr.bf16.mxu0 0
        %800 = vmatpush1.bf16.msra.mxu0 %v432
        %801 = vmatprep.subr.bf16.mxu0 0
        %802 = vmatpush1.bf16.msra.mxu0 0
        %803 = vmatprep.subr.bf16.mxu0 0
        %804 = vmatpush1.bf16.msra.mxu0 0
        %805 = vmatprep.subr.bf16.mxu0 0
        %806 = vmatpush1.bf16.msra.mxu0 0
        %807 = vmatprep.subr.bf16.mxu0 0
        %808 = vmatpush1.bf16.msra.mxu0 0
        %809 = vmatprep.subr.bf16.mxu0 0
        %810 = vmatpush1.bf16.msra.mxu0 0
        %811 = vmatprep.subr.bf16.mxu0 0
        %812 = vmatpush1.bf16.msra.mxu0 0
        %813 = vmatprep.subr.bf16.mxu0 0
        %814 = vmatpush1.bf16.msra.mxu0 0
        %815 = vmatprep.subr.bf16.mxu0 0
        %816 = vmatpush1.bf16.msra.mxu0 0
        %817 = vmatprep.subr.bf16.mxu0 0
        %818 = vmatpush1.bf16.msra.mxu0 0
        %819 = vmatprep.subr.bf16.mxu0 0
        %820 = vmatpush1.bf16.msra.mxu0 0
        %821 = vmatprep.subr.bf16.mxu0 0
        %822 = vmatpush1.bf16.msra.mxu0 0
        %823 = vmatprep.subr.bf16.mxu0 0
        %824 = vmatpush1.bf16.msra.mxu0 0
        %825 = vmatprep.subr.bf16.mxu0 0
        %826 = vmatpush1.bf16.msra.mxu0 0
        %827 = vmatprep.subr.bf16.mxu0 0
        %828 = vmatpush1.bf16.msra.mxu0 0
        %829 = vmatprep.mubr.bf16.mxu0 0
        %830 = vmatmul.mubr.bf16.gmra.mrb[0].mxu0 %v795
        %v831 = vpop.f32.mrb[0].mxu0
        %v832 = vadd.f32 0.0, %v831
        %v833 = vpop.f32.mrb[0].mxu0
        %v834 = vpop.f32.mrb[0].mxu0
        %v835 = vpop.f32.mrb[0].mxu0
        %836 = vdwg.mxu0
        %v837 = vpack.c.bf16 %v832, %v832
        %839 = vrot.lane.b32.xlu0 %v837, 96
        %v840 = vpop.permute.xlu0 %839
        %v842 = vsel %vm487, %v840, 0
        %844 = vmatprep.subr.bf16.mxu0 0
        %845 = vmatpush1.bf16.msra.mxu0 %v842
        %846 = vmatprep.subr.bf16.mxu0 0
        %847 = vmatpush1.bf16.msra.mxu0 0
        %848 = vmatprep.subr.bf16.mxu0 0
        %849 = vmatpush1.bf16.msra.mxu0 0
        %850 = vmatprep.subr.bf16.mxu0 0
        %851 = vmatpush1.bf16.msra.mxu0 0
        %852 = vmatprep.subr.bf16.mxu0 0
        %853 = vmatpush1.bf16.msra.mxu0 0
        %854 = vmatprep.subr.bf16.mxu0 0
        %855 = vmatpush1.bf16.msra.mxu0 0
        %856 = vmatprep.subr.bf16.mxu0 0
        %857 = vmatpush1.bf16.msra.mxu0 0
        %858 = vmatprep.subr.bf16.mxu0 0
        %859 = vmatpush1.bf16.msra.mxu0 0
        %860 = vmatprep.subr.bf16.mxu0 0
        %861 = vmatpush1.bf16.msra.mxu0 0
        %862 = vmatprep.subr.bf16.mxu0 0
        %863 = vmatpush1.bf16.msra.mxu0 0
        %864 = vmatprep.subr.bf16.mxu0 0
        %865 = vmatpush1.bf16.msra.mxu0 0
        %866 = vmatprep.subr.bf16.mxu0 0
        %867 = vmatpush1.bf16.msra.mxu0 0
        %868 = vmatprep.subr.bf16.mxu0 0
        %869 = vmatpush1.bf16.msra.mxu0 0
        %870 = vmatprep.subr.bf16.mxu0 0
        %871 = vmatpush1.bf16.msra.mxu0 0
        %872 = vmatprep.subr.bf16.mxu0 0
        %873 = vmatpush1.bf16.msra.mxu0 0
        %874 = vmatprep.subr.bf16.mxu0 0
        %875 = vmatpush1.bf16.msra.mxu0 0
        %876 = vmatprep.mubr.bf16.mxu0 0
        %877 = vmatmul.mubr.bf16.gmra.mrb[0].mxu0 %v485
        %v878 = vpop.f32.mrb[0].mxu0
        %v879 = vadd.f32 0.0, %v878
        %v880 = vpop.f32.mrb[0].mxu0
        %v881 = vpop.f32.mrb[0].mxu0
        %v882 = vpop.f32.mrb[0].mxu0
        %883 = vdwg.mxu0
        %v885 = vsel %vm487, %v837, 0
        %887 = vmatprep.subr.bf16.mxu0 0
        %888 = vmatpush1.bf16.msra.mxu0 %v885
        %889 = vmatprep.subr.bf16.mxu0 0
        %890 = vmatpush1.bf16.msra.mxu0 0
        %891 = vmatprep.subr.bf16.mxu0 0
        %892 = vmatpush1.bf16.msra.mxu0 0
        %893 = vmatprep.subr.bf16.mxu0 0
        %894 = vmatpush1.bf16.msra.mxu0 0
        %895 = vmatprep.subr.bf16.mxu0 0
        %896 = vmatpush1.bf16.msra.mxu0 0
        %897 = vmatprep.subr.bf16.mxu0 0
        %898 = vmatpush1.bf16.msra.mxu0 0
        %899 = vmatprep.subr.bf16.mxu0 0
        %900 = vmatpush1.bf16.msra.mxu0 0
        %901 = vmatprep.subr.bf16.mxu0 0
        %902 = vmatpush1.bf16.msra.mxu0 0
        %903 = vmatprep.subr.bf16.mxu0 0
        %904 = vmatpush1.bf16.msra.mxu0 0
        %905 = vmatprep.subr.bf16.mxu0 0
        %906 = vmatpush1.bf16.msra.mxu0 0
        %907 = vmatprep.subr.bf16.mxu0 0
        %908 = vmatpush1.bf16.msra.mxu0 0
        %909 = vmatprep.subr.bf16.mxu0 0
        %910 = vmatpush1.bf16.msra.mxu0 0
        %911 = vmatprep.subr.bf16.mxu0 0
        %912 = vmatpush1.bf16.msra.mxu0 0
        %913 = vmatprep.subr.bf16.mxu0 0
        %914 = vmatpush1.bf16.msra.mxu0 0
        %915 = vmatprep.subr.bf16.mxu0 0
        %916 = vmatpush1.bf16.msra.mxu0 0
        %917 = vmatprep.subr.bf16.mxu0 0
        %918 = vmatpush1.bf16.msra.mxu0 0
        %919 = vmatprep.mubr.bf16.mxu0 0
        %920 = vmatmul.mubr.bf16.gmra.mrb[0].mxu0 %v532
        %v921 = vpop.f32.mrb[0].mxu0
        %v922 = vadd.f32 %v879, %v921
        %v923 = vpop.f32.mrb[0].mxu0
        %v924 = vpop.f32.mrb[0].mxu0
        %v925 = vpop.f32.mrb[0].mxu0
        %926 = vdwg.mxu0
        %v927 = vadd.f32 %v792, %v922
        %v928 = vsel %vm435, %v927, 0.0
        %929 = vadd.xlane.f32.xlu0 %v928
        %v930 = vpop.xlane.xlu0 %929
        %v931 = vmul.f32 %v930, %v581
        %v932 = vsub.f32 %v927, %v931
        %v933 = vmul.f32 %v932, %v932
        %v934 = vsel %vm435, %v933, 0.0
        %935 = vadd.xlane.f32.xlu0 %v934
        %v936 = vpop.xlane.xlu0 %935
        %v937 = vmul.f32 %v936, %v581
        %v938 = vadd.f32 %v937, 1e-12
        %v939 = vrsqrt.pop %v938
        %v940 = vmul.f32 %v932, %v939
        %v941 = vmul.f32 %v940, %v595
        %v942 = vadd.f32 %v941, %v600
        %v943 = vpack.c.bf16 %v942, %v942
        %v945 = vsel %vm435, %v943, 0
        %947 = vmatprep.subr.bf16.mxu0 0
        %948 = vmatpush1.bf16.msra.mxu0 %v617
        %949 = vmatprep.subr.bf16.mxu0 0
        %950 = vmatpush1.bf16.msra.mxu0 %v618
        %951 = vmatprep.subr.bf16.mxu0 0
        %952 = vmatpush1.bf16.msra.mxu0 0
        %953 = vmatprep.subr.bf16.mxu0 0
        %954 = vmatpush1.bf16.msra.mxu0 0
        %955 = vmatprep.subr.bf16.mxu0 0
        %956 = vmatpush1.bf16.msra.mxu0 0
        %957 = vmatprep.subr.bf16.mxu0 0
        %958 = vmatpush1.bf16.msra.mxu0 0
        %959 = vmatprep.subr.bf16.mxu0 0
        %960 = vmatpush1.bf16.msra.mxu0 0
        %961 = vmatprep.subr.bf16.mxu0 0
        %962 = vmatpush1.bf16.msra.mxu0 0
        %963 = vmatprep.subr.bf16.mxu0 0
        %964 = vmatpush1.bf16.msra.mxu0 0
        %965 = vmatprep.subr.bf16.mxu0 0
        %966 = vmatpush1.bf16.msra.mxu0 0
        %967 = vmatprep.subr.bf16.mxu0 0
        %968 = vmatpush1.bf16.msra.mxu0 0
        %969 = vmatprep.subr.bf16.mxu0 0
        %970 = vmatpush1.bf16.msra.mxu0 0
        %971 = vmatprep.subr.bf16.mxu0 0
        %972 = vmatpush1.bf16.msra.mxu0 0
        %973 = vmatprep.subr.bf16.mxu0 0
        %974 = vmatpush1.bf16.msra.mxu0 0
        %975 = vmatprep.subr.bf16.mxu0 0
        %976 = vmatpush1.bf16.msra.mxu0 0
        %977 = vmatprep.subr.bf16.mxu0 0
        %978 = vmatpush1.bf16.msra.mxu0 0
        %979 = vmatprep.mubr.bf16.mxu0 0
        %980 = vmatmul.mubr.bf16.gmra.mrb[0].mxu0 %v945
        %v981 = vpop.f32.mrb[0].mxu0
        %v982 = vadd.f32 %v607, %v981
        %v983 = vpop.f32.mrb[0].mxu0
        %v984 = vpop.f32.mrb[0].mxu0
        %v985 = vpop.f32.mrb[0].mxu0
        %986 = vdwg.mxu0
        %v987 = vmul.f32 %v982, 0.5
        %v988 = vmul.f32 %v982, 0.044715
        %v989 = vmul.f32 %v988, %v982
        %v990 = vmul.f32 %v989, %v982
        %v991 = vadd.f32 %v982, %v990
        %v992 = vmul.f32 %v991, 0.7978846
        %v993 = vtanh.pop %v992
        %v994 = vadd.f32 %v993, 1.0
        %v995 = vmul.f32 %v987, %v994
        %v996 = vpack.c.bf16 %v995, %v995
        %997 = vmatprep.subr.bf16.mxu0 0
        %998 = vmatpush1.bf16.msra.mxu0 %v710
        %999 = vmatprep.subr.bf16.mxu0 0
        %1000 = vmatpush1.bf16.msra.mxu0 %v711
        %1001 = vmatprep.subr.bf16.mxu0 0
        %1002 = vmatpush1.bf16.msra.mxu0 %v712
        %1003 = vmatprep.subr.bf16.mxu0 0
        %1004 = vmatpush1.bf16.msra.mxu0 %v713
        %1005 = vmatprep.subr.bf16.mxu0 0
        %1006 = vmatpush1.bf16.msra.mxu0 %v714
        %1007 = vmatprep.subr.bf16.mxu0 0
        %1008 = vmatpush1.bf16.msra.mxu0 %v715
        %1009 = vmatprep.subr.bf16.mxu0 0
        %1010 = vmatpush1.bf16.msra.mxu0 %v716
        %1011 = vmatprep.subr.bf16.mxu0 0
        %1012 = vmatpush1.bf16.msra.mxu0 %v717
        %1013 = vmatprep.subr.bf16.mxu0 0
        %1014 = vmatpush1.bf16.msra.mxu0 0
        %1015 = vmatprep.subr.bf16.mxu0 0
        %1016 = vmatpush1.bf16.msra.mxu0 0
        %1017 = vmatprep.subr.bf16.mxu0 0
        %1018 = vmatpush1.bf16.msra.mxu0 0
        %1019 = vmatprep.subr.bf16.mxu0 0
        %1020 = vmatpush1.bf16.msra.mxu0 0
        %1021 = vmatprep.subr.bf16.mxu0 0
        %1022 = vmatpush1.bf16.msra.mxu0 0
        %1023 = vmatprep.subr.bf16.mxu0 0
        %1024 = vmatpush1.bf16.msra.mxu0 0
        %1025 = vmatprep.subr.bf16.mxu0 0
        %1026 = vmatpush1.bf16.msra.mxu0 0
        %1027 = vmatprep.subr.bf16.mxu0 0
        %1028 = vmatpush1.bf16.msra.mxu0 0
        %1029 = vmatprep.mubr.bf16.mxu0 0
        %1030 = vmatmul.mubr.bf16.gmra.mrb[0].mxu0 %v996
        %v1031 = vpop.f32.mrb[0].mxu0
        %v1032 = vadd.f32 %v677, %v1031
        %v1033 = vpop.f32.mrb[0].mxu0
        %v1034 = vpop.f32.mrb[0].mxu0
        %v1035 = vpop.f32.mrb[0].mxu0
        %1036 = vdwg.mxu0
        %v1037 = vadd.f32 %v1032, %v942
        %v1038 = vsel %vm435, %v1037, 0.0
        %1039 = vadd.xlane.f32.xlu0 %v1038
        %v1040 = vpop.xlane.xlu0 %1039
        %v1041 = vmul.f32 %v1040, %v581
        %v1042 = vsub.f32 %v1037, %v1041
        %v1043 = vmul.f32 %v1042, %v1042
        %v1044 = vsel %vm435, %v1043, 0.0
        %1045 = vadd.xlane.f32.xlu0 %v1044
        %v1046 = vpop.xlane.xlu0 %1045
        %v1047 = vmul.f32 %v1046, %v581
        %v1048 = vadd.f32 %v1047, 1e-12
        %v1049 = vrsqrt.pop %v1048
        %v1050 = vmul.f32 %v1042, %v1049
        %v1051 = vmul.f32 %v1050, %v783
        %v1052 = vadd.f32 %v1051, %v788
        %1053 = vst.msk [vmem:[%s791] sm:$0xff] %vm435, %v1052
        // Predicated region
        $region57: #{tpu_custom_call.1} parent=51 // pred_check
          %p1054 = pneg %p243
        $region58: #{tpu_custom_call.1} parent=51 // pred_check_branch
          %1056 = sbr.rel (%p1054) target = $region60
        $region59: #{tpu_custom_call.1} parent=51 // pred_region
          %s1057 = smul.u32 2, %s24
          %s1059 = ssub.s32 256, 256
          %1060 = vsyncadd [#allocation3], %s1059
          %s1061 = smul.addr %s1057, 128
          %s1062 = scalar_lea.hbm %s8, %s1061
          %s1063 = sshll.u32 [#allocation2], 4
          %s1064 = int_to_ptr.vmem [resolvable:$true] %s1063
          %1069 = dma.vmem_to_hbm [thread:$0]  %s1064, 256, %s1062, [#allocation3], 128, 128, 8
        $region60: #{tpu_custom_call.1} parent=51 // pred_fallthru
          _
        // Predicated region
        $region61: #{tpu_custom_call.1} parent=51 // pred_check
          %p1070 = pneg %p243
        $region62: #{tpu_custom_call.1} parent=51 // pred_check_branch
          %1072 = sbr.rel (%p1070) target = $region64
        $region63: #{tpu_custom_call.1} parent=51 // pred_region
          %1073 = dma.done [#allocation3], 256
        $region64: #{tpu_custom_call.1} parent=51 // pred_fallthru
          _
      $region52: #{tpu_custom_call.1} parent=5 // pred_fallthru
        _
      %p1074 = scmp.le.s32.totalorder 2, %s15
      // Predicated region
      $region65: #{tpu_custom_call.1} parent=5 // pred_check
        %p1075 = pneg %p1074
      $region66: #{tpu_custom_call.1} parent=5 // pred_check_branch
        %1077 = sbr.rel (%p1075) target = $region68
      $region67: #{tpu_custom_call.1} parent=5 // pred_region
        %s1078 = ssub.s32 %s15, 2
      $region68: #{tpu_custom_call.1} parent=5 // pred_fallthru
        _
    $region6: #{tpu_custom_call.1} parent=1 // loop_footer
      %s19 = sadd.s32 1, %s15
    $region7: #{tpu_custom_call.1} parent=1 // loop_footer_branch
      %14 = sbr.rel target = $region3
    $region8: #{tpu_custom_call.1} parent=1 // loop_exit
      _
    %1079 = vsyncpa [#allocation3], 1
    %s1080 = scalar_lea.sflag [#allocation3], 1
    %1081 = vsyncpa %s1080, 1

// kernel: tpu_custom_call.1
$region0: #{tpu_custom_call.1}
  #allocation0 [shape = 'u32[]', space=smem, size = 0x4, offset = 0x4, fixed_abs, tag = 'smem constant byte address 0x4 - core index']
  #allocation1 [shape = 'u32[144,128]{1,0:T(1,128)}', space=vmem, size = 0x12000, scoped, tag = 'internal scratch']
  %s0 = inlined_call_operand.vmem [shape: f32[2,8,32], index: 0, kind: input, shape index: {}]
  %s1 = inlined_call_operand.vmem [shape: bf16[8,8], index: 1, kind: input, shape index: {}]
  %s2 = inlined_call_operand.vmem [shape: bf16[8,8], index: 2, kind: input, shape index: {}]
  %s3 = inlined_call_operand.vmem [shape: bf16[32,64], index: 3, kind: input, shape index: {}]
  %s4 = inlined_call_operand.vmem [shape: f32[2,5,32], index: 4, kind: input, shape index: {}]
  %s5 = inlined_call_operand.vmem [shape: f32[2,1,128], index: 5, kind: input, shape index: {}]
  %s6 = inlined_call_operand.vmem [shape: bf16[2,32,128], index: 6, kind: input, shape index: {}]
  %s7 = inlined_call_operand.vmem [shape: bf16[2,128,32], index: 7, kind: input, shape index: {}]
  %s8 = inlined_call_operand.hbm [shape: f32[2,8,32], index: 8, kind: output, shape index: {}]
  %s9 = sld [smem:[#allocation0]]
  $region69: #{tpu_custom_call.1} parent=0
    _
  %s11 = ssub.s32 1, %s9
  %s12 = scalar_select 0, %s11, %s9
  $region1: #{tpu_custom_call.1} parent=0
    #allocation2 [shape = 'u8[8192]{0}', space=vmem, size = 0x2000, scoped, tag = 'output window, operand 0, single buffered']
    #allocation3 [shape = 's32[2]{0}', space=sflag, size = 0x8, scoped, tag = 'scoped memory for tpu_custom_call.1']
    %13 = vsyncpa [#allocation3], 0
    loop: start=0, step=1, limit=4
    $region2: #{tpu_custom_call.1} parent=1 // loop_pre_header
      _
    $region3: #{tpu_custom_call.1} parent=1 // loop_header
      %s15 = sphi 0, %s19
      %p16 = scmp.ge.s32.totalorder %s15, 4
      %s22 = sphi 0, %s34
      %s23 = sphi 0, %s30
      %s24 = sphi 0, %s22
      %s25 = sphi 0, %s23
      %s26 = sphi 0, %s24
      %s27 = sphi 0, %s25
      %s37 = sphi 0, %s39
      %s40 = sphi 0, %s37
      %s41 = sphi 0, %s40
      %s57 = sphi 0, %s41
      %s61 = sphi 0, %s61
      %s63 = sphi 0, %s61
      %s64 = sphi 0, %s63
      %s78 = sphi 0, %s64
      %s82 = sphi 0, %s82
      %s84 = sphi 0, %s82
      %s85 = sphi 0, %s84
      %s99 = sphi 0, %s85
      %s103 = sphi 0, %s103
      %s105 = sphi 0, %s103
      %s106 = sphi 0, %s105
      %s120 = sphi 0, %s106
      %s126 = sphi 0, %s128
      %s129 = sphi 0, %s126
      %s130 = sphi 0, %s129
      %s146 = sphi 0, %s130
      %s152 = sphi 0, %s154
      %s155 = sphi 0, %s152
      %s156 = sphi 0, %s155
      %s172 = sphi 0, %s156
      %s178 = sphi 0, %s180
      %s181 = sphi 0, %s178
      %s182 = sphi 0, %s181
      %s198 = sphi 0, %s182
      %s204 = sphi 0, %s206
      %s207 = sphi 0, %s204
      %s208 = sphi 0, %s207
      %s224 = sphi 0, %s208
      %s230 = sphi 0, %s232
      %s233 = sphi 0, %s230
      %s234 = sphi 0, %s233
      %s250 = sphi 0, %s234
    $region4: #{tpu_custom_call.1} parent=1 // loop_header_branch
      %18 = sbr.rel (%p16) target = $region8
    $region5: #{tpu_custom_call.1} parent=1 // loop_body
      %s20 = ssub.s32 %s15, 1
      %s21 = ssub.s32 %s15, 2
      %s28 = sadd.s32 1, %s23
      %p29 = scmp.ge.s32.totalorder %s28, 2
      %s30 = scalar_select %p29, 0, %s28
      %s31 = sadd.s32 1, %s22
      %s32 = scalar_select %p29, %s31, %s22
      %p33 = scmp.ge.s32.totalorder %s32, 1
      %s34 = scalar_select %p33, 0, %s32
      %s35 = ssub.s32 %s22, %s34
      %p36 = scmp.eq.s32.totalorder %s35, 0
      %s38 = sadd.s32 %s37, 1
      %s39 = scalar_select %p36, %s37, %s38
      %p42 = pneg %p36
      %p43 = scmp.eq.s32.totalorder %s15, 1
      %p44 = por %p42, %p43
      %p45 = scmp.ne.s32.totalorder %s37, %s40
      %p46 = scmp.eq.s32.totalorder %s15, 0
      %p47 = por %p45, %p46
      %p48 = scmp.ne.s32.totalorder %s37, %s40
      %p49 = scmp.eq.s32.totalorder %s20, 1
      %p50 = por %p48, %p49
      %p51 = scmp.ne.s32.totalorder %s40, %s41
      %p52 = scmp.eq.s32.totalorder %s20, 0
      %p53 = por %p51, %p52
      %p54 = scmp.ne.s32.totalorder %s40, %s41
      %p55 = scmp.eq.s32.totalorder %s21, 1
      %p56 = por %p54, %p55
      %p58 = scmp.ne.s32.totalorder %s41, %s57
      %p59 = scmp.eq.s32.totalorder %s21, 0
      %p60 = por %p58, %p59
      %s62 = sadd.s32 %s61, 1
      %p65 = scmp.eq.s32.totalorder %s15, 1
      %p66 = scmp.ne.s32.totalorder %s61, %s63
      %p67 = scmp.eq.s32.totalorder %s15, 0
      %p68 = por %p66, %p67
      %p69 = scmp.ne.s32.totalorder %s61, %s63
      %p70 = scmp.eq.s32.totalorder %s20, 1
      %p71 = por %p69, %p70
      %p72 = scmp.ne.s32.totalorder %s63, %s64
      %p73 = scmp.eq.s32.totalorder %s20, 0
      %p74 = por %p72, %p73
      %p75 = scmp.ne.s32.totalorder %s63, %s64
      %p76 = scmp.eq.s32.totalorder %s21, 1
      %p77 = por %p75, %p76
      %p79 = scmp.ne.s32.totalorder %s64, %s78
      %p80 = scmp.eq.s32.totalorder %s21, 0
      %p81 = por %p79, %p80
      %s83 = sadd.s32 %s82, 1
      %p86 = scmp.eq.s32.totalorder %s15, 1
      %p87 = scmp.ne.s32.totalorder %s82, %s84
      %p88 = scmp.eq.s32.totalorder %s15, 0
      %p89 = por %p87, %p88
      %p90 = scmp.ne.s32.totalorder %s82, %s84
      %p91 = scmp.eq.s32.totalorder %s20, 1
      %p92 = por %p90, %p91
      %p93 = scmp.ne.s32.totalorder %s84, %s85
      %p94 = scmp.eq.s32.totalorder %s20, 0
      %p95 = por %p93, %p94
      %p96 = scmp.ne.s32.totalorder %s84, %s85
      %p97 = scmp.eq.s32.totalorder %s21, 1
      %p98 = por %p96, %p97
      %p100 = scmp.ne.s32.totalorder %s85, %s99
      %p101 = scmp.eq.s32.totalorder %s21, 0
      %p102 = por %p100, %p101
      %s104 = sadd.s32 %s103, 1
      %p107 = scmp.eq.s32.totalorder %s15, 1
      %p108 = scmp.ne.s32.totalorder %s103, %s105
      %p109 = scmp.eq.s32.totalorder %s15, 0
      %p110 = por %p108, %p109
      %p111 = scmp.ne.s32.totalorder %s103, %s105
      %p112 = scmp.eq.s32.totalorder %s20, 1
      %p113 = por %p111, %p112
      %p114 = scmp.ne.s32.totalorder %s105, %s106
      %p115 = scmp.eq.s32.totalorder %s20, 0
      %p116 = por %p114, %p115
      %p117 = scmp.ne.s32.totalorder %s105, %s106
      %p118 = scmp.eq.s32.totalorder %s21, 1
      %p119 = por %p117, %p118
      %p121 = scmp.ne.s32.totalorder %s106, %s120
      %p122 = scmp.eq.s32.totalorder %s21, 0
      %p123 = por %p121, %p122
      %s124 = ssub.s32 %s23, %s30
      %p125 = scmp.eq.s32.totalorder %s124, 0
      %s127 = sadd.s32 %s126, 1
      %s128 = scalar_select %p125, %s126, %s127
      %p131 = pneg %p125
      %p132 = scmp.eq.s32.totalorder %s15, 1
      %p133 = por %p131, %p132
      %p134 = scmp.ne.s32.totalorder %s126, %s129
      %p135 = scmp.eq.s32.totalorder %s15, 0
      %p136 = por %p134, %p135
      %p137 = scmp.ne.s32.totalorder %s126, %s129
      %p138 = scmp.eq.s32.totalorder %s20, 1
      %p139 = por %p137, %p138
      %p140 = scmp.ne.s32.totalorder %s129, %s130
      %p141 = scmp.eq.s32.totalorder %s20, 0
      %p142 = por %p140, %p141
      %p143 = scmp.ne.s32.totalorder %s129, %s130
      %p144 = scmp.eq.s32.totalorder %s21, 1
      %p145 = por %p143, %p144
      %p147 = scmp.ne.s32.totalorder %s130, %s146
      %p148 = scmp.eq.s32.totalorder %s21, 0
      %p149 = por %p147, %p148
      %s150 = ssub.s32 %s23, %s30
      %p151 = scmp.eq.s32.totalorder %s150, 0
      %s153 = sadd.s32 %s152, 1
      %s154 = scalar_select %p151, %s152, %s153
      %p157 = pneg %p151
      %p158 = scmp.eq.s32.totalorder %s15, 1
      %p159 = por %p157, %p158
      %p160 = scmp.ne.s32.totalorder %s152, %s155
      %p161 = scmp.eq.s32.totalorder %s15, 0
      %p162 = por %p160, %p161
      %p163 = scmp.ne.s32.totalorder %s152, %s155
      %p164 = scmp.eq.s32.totalorder %s20, 1
      %p165 = por %p163, %p164
      %p166 = scmp.ne.s32.totalorder %s155, %s156
      %p167 = scmp.eq.s32.totalorder %s20, 0
      %p168 = por %p166, %p167
      %p169 = scmp.ne.s32.totalorder %s155, %s156
      %p170 = scmp.eq.s32.totalorder %s21, 1
      %p171 = por %p169, %p170
      %p173 = scmp.ne.s32.totalorder %s156, %s172
      %p174 = scmp.eq.s32.totalorder %s21, 0
      %p175 = por %p173, %p174
      %s176 = ssub.s32 %s23, %s30
      %p177 = scmp.eq.s32.totalorder %s176, 0
      %s179 = sadd.s32 %s178, 1
      %s180 = scalar_select %p177, %s178, %s179
      %p183 = pneg %p177
      %p184 = scmp.eq.s32.totalorder %s15, 1
      %p185 = por %p183, %p184
      %p186 = scmp.ne.s32.totalorder %s178, %s181
      %p187 = scmp.eq.s32.totalorder %s15, 0
      %p188 = por %p186, %p187
      %p189 = scmp.ne.s32.totalorder %s178, %s181
      %p190 = scmp.eq.s32.totalorder %s20, 1
      %p191 = por %p189, %p190
      %p192 = scmp.ne.s32.totalorder %s181, %s182
      %p193 = scmp.eq.s32.totalorder %s20, 0
      %p194 = por %p192, %p193
      %p195 = scmp.ne.s32.totalorder %s181, %s182
      %p196 = scmp.eq.s32.totalorder %s21, 1
      %p197 = por %p195, %p196
      %p199 = scmp.ne.s32.totalorder %s182, %s198
      %p200 = scmp.eq.s32.totalorder %s21, 0
      %p201 = por %p199, %p200
      %s202 = ssub.s32 %s23, %s30
      %p203 = scmp.eq.s32.totalorder %s202, 0
      %s205 = sadd.s32 %s204, 1
      %s206 = scalar_select %p203, %s204, %s205
      %p209 = pneg %p203
      %p210 = scmp.eq.s32.totalorder %s15, 1
      %p211 = por %p209, %p210
      %p212 = scmp.ne.s32.totalorder %s204, %s207
      %p213 = scmp.eq.s32.totalorder %s15, 0
      %p214 = por %p212, %p213
      %p215 = scmp.ne.s32.totalorder %s204, %s207
      %p216 = scmp.eq.s32.totalorder %s20, 1
      %p217 = por %p215, %p216
      %p218 = scmp.ne.s32.totalorder %s207, %s208
      %p219 = scmp.eq.s32.totalorder %s20, 0
      %p220 = por %p218, %p219
      %p221 = scmp.ne.s32.totalorder %s207, %s208
      %p222 = scmp.eq.s32.totalorder %s21, 1
      %p223 = por %p221, %p222
      %p225 = scmp.ne.s32.totalorder %s208, %s224
      %p226 = scmp.eq.s32.totalorder %s21, 0
      %p227 = por %p225, %p226
      %s228 = ssub.s32 %s22, %s34
      %p229 = scmp.eq.s32.totalorder %s228, 0
      %s231 = sadd.s32 %s230, 1
      %s232 = scalar_select %p229, %s230, %s231
      %p235 = pneg %p229
      %p236 = scmp.eq.s32.totalorder %s15, 1
      %p237 = por %p235, %p236
      %p238 = scmp.ne.s32.totalorder %s230, %s233
      %p239 = scmp.eq.s32.totalorder %s15, 0
      %p240 = por %p238, %p239
      %p241 = scmp.ne.s32.totalorder %s230, %s233
      %p242 = scmp.eq.s32.totalorder %s20, 1
      %p243 = por %p241, %p242
      %p244 = scmp.ne.s32.totalorder %s233, %s234
      %p245 = scmp.eq.s32.totalorder %s20, 0
      %p246 = por %p244, %p245
      %p247 = scmp.ne.s32.totalorder %s233, %s234
      %p248 = scmp.eq.s32.totalorder %s21, 1
      %p249 = por %p247, %p248
      %p251 = scmp.ne.s32.totalorder %s234, %s250
      %p252 = scmp.eq.s32.totalorder %s21, 0
      %p253 = por %p251, %p252
      %p254 = scmp.le.s32.totalorder 1, %s15
      %p255 = scmp.lt.s32.totalorder %s15, 3
      %p256 = pnand %p254, %p255
      %p257 = pneg %p256
      // Predicated region
      $region9: #{tpu_custom_call.1} parent=5 // pred_check
        _
      $region10: #{tpu_custom_call.1} parent=5 // pred_check_branch
        %259 = sbr.rel (%p256) target = $region12
      $region11: #{tpu_custom_call.1} parent=5 // pred_region
        %s260 = ssub.s32 %s15, 1
        // Predicated region
        $region13: #{tpu_custom_call.1} parent=11 // pred_check
          %p261 = pneg %p53
        $region14: #{tpu_custom_call.1} parent=11 // pred_check_branch
          %263 = sbr.rel (%p261) target = $region16
        $region15: #{tpu_custom_call.1} parent=11 // pred_region
          %s264 = smul.u32 2, %s24
          %p265 = scmp.lt.s32.totalorder %s264, 1
          %s266 = scalar_select %p265, %s264, 1
          %s267 = smul.addr %s266, 8
          %s268 = scalar_lea.vmem %s0, %s267
          %s269 = smul.u32 2, %s24
        $region16: #{tpu_custom_call.1} parent=11 // pred_fallthru
          _
        // Predicated region
        $region17: #{tpu_custom_call.1} parent=11 // pred_check
          %p270 = pneg %p74
        $region18: #{tpu_custom_call.1} parent=11 // pred_check_branch
          %272 = sbr.rel (%p270) target = $region20
        $region19: #{tpu_custom_call.1} parent=11 // pred_region
          _
        $region20: #{tpu_custom_call.1} parent=11 // pred_fallthru
          _
        // Predicated region
        $region21: #{tpu_custom_call.1} parent=11 // pred_check
          %p273 = pneg %p95
        $region22: #{tpu_custom_call.1} parent=11 // pred_check_branch
          %275 = sbr.rel (%p273) target = $region24
        $region23: #{tpu_custom_call.1} parent=11 // pred_region
          _
        $region24: #{tpu_custom_call.1} parent=11 // pred_fallthru
          _
        // Predicated region
        $region25: #{tpu_custom_call.1} parent=11 // pred_check
          %p276 = pneg %p116
        $region26: #{tpu_custom_call.1} parent=11 // pred_check_branch
          %278 = sbr.rel (%p276) target = $region28
        $region27: #{tpu_custom_call.1} parent=11 // pred_region
          _
        $region28: #{tpu_custom_call.1} parent=11 // pred_fallthru
          _
      $region12: #{tpu_custom_call.1} parent=5 // pred_fallthru
        _
      %p279 = scmp.lt.s32.totalorder %s15, 2
      // Predicated region
      $region29: #{tpu_custom_call.1} parent=5 // pred_check
        %p280 = pneg %p279
      $region30: #{tpu_custom_call.1} parent=5 // pred_check_branch
        %282 = sbr.rel (%p280) target = $region32
      $region31: #{tpu_custom_call.1} parent=5 // pred_region
        // Predicated region
        $region33: #{tpu_custom_call.1} parent=31 // pred_check
          %p283 = pneg %p136
        $region34: #{tpu_custom_call.1} parent=31 // pred_check_branch
          %285 = sbr.rel (%p283) target = $region36
        $region35: #{tpu_custom_call.1} parent=31 // pred_region
          %p286 = scmp.lt.s32.totalorder %s23, 1
          %s287 = scalar_select %p286, %s23, 1
          %s288 = smul.addr %s287, 8
          %s289 = scalar_lea.vmem %s4, %s288
        $region36: #{tpu_custom_call.1} parent=31 // pred_fallthru
          _
        // Predicated region
        $region37: #{tpu_custom_call.1} parent=31 // pred_check
          %p290 = pneg %p162
        $region38: #{tpu_custom_call.1} parent=31 // pred_check_branch
          %292 = sbr.rel (%p290) target = $region40
        $region39: #{tpu_custom_call.1} parent=31 // pred_region
          %p293 = scmp.lt.s32.totalorder %s23, 1
          %s294 = scalar_select %p293, %s23, 1
          %s295 = scalar_lea.vmem %s5, %s294
        $region40: #{tpu_custom_call.1} parent=31 // pred_fallthru
          _
        // Predicated region
        $region41: #{tpu_custom_call.1} parent=31 // pred_check
          %p296 = pneg %p188
        $region42: #{tpu_custom_call.1} parent=31 // pred_check_branch
          %298 = sbr.rel (%p296) target = $region44
        $region43: #{tpu_custom_call.1} parent=31 // pred_region
          %p299 = scmp.lt.s32.totalorder %s23, 1
          %s300 = scalar_select %p299, %s23, 1
          %s301 = smul.addr %s300, 4
          %s302 = smul.addr %s301, 4
          %s303 = scalar_lea.vmem %s6, %s302
        $region44: #{tpu_custom_call.1} parent=31 // pred_fallthru
          _
        // Predicated region
        $region45: #{tpu_custom_call.1} parent=31 // pred_check
          %p304 = pneg %p214
        $region46: #{tpu_custom_call.1} parent=31 // pred_check_branch
          %306 = sbr.rel (%p304) target = $region48
        $region47: #{tpu_custom_call.1} parent=31 // pred_region
          %p307 = scmp.lt.s32.totalorder %s23, 1
          %s308 = scalar_select %p307, %s23, 1
          %s309 = smul.addr %s308, 16
          %s310 = smul.addr %s309, 4
          %s311 = scalar_lea.vmem %s7, %s310
        $region48: #{tpu_custom_call.1} parent=31 // pred_fallthru
          _
      $region32: #{tpu_custom_call.1} parent=5 // pred_fallthru
        _
      %p312 = scmp.le.s32.totalorder 1, %s15
      %p313 = scmp.lt.s32.totalorder %s15, 3
      %p314 = pnand %p312, %p313
      %p315 = pneg %p314
      // Predicated region
      $region49: #{tpu_custom_call.1} parent=5 // pred_check
        _
      $region50: #{tpu_custom_call.1} parent=5 // pred_check_branch
        %317 = sbr.rel (%p314) target = $region52
      $region51: #{tpu_custom_call.1} parent=5 // pred_region
        %s318 = ssub.s32 %s15, 1
        %s319 = smul.u32 2, %s24
        %p320 = scmp.lt.s32.totalorder %s319, 1
        %s321 = scalar_select %p320, %s319, 1
        %s322 = smul.addr %s321, 8
        %s323 = scalar_lea.vmem %s0, %s322
        %p324 = pneg %p53
        %p325 = pneg %p50
        %p326 = pneg %p74
        %p327 = pneg %p71
        %p328 = pneg %p95
        %p329 = pneg %p92
        %p330 = pneg %p116
        %p331 = pneg %p113
        %p332 = scmp.lt.s32.totalorder %s25, 1
        %s333 = scalar_select %p332, %s25, 1
        %s334 = smul.addr %s333, 8
        %s335 = scalar_lea.vmem %s4, %s334
        %p336 = pneg %p142
        %p337 = pneg %p139
        %p338 = scmp.lt.s32.totalorder %s25, 1
        %s339 = scalar_select %p338, %s25, 1
        %s340 = scalar_lea.vmem %s5, %s339
        %p341 = pneg %p168
        %p342 = pneg %p165
        %p343 = scmp.lt.s32.totalorder %s25, 1
        %s344 = scalar_select %p343, %s25, 1
        %s345 = smul.addr %s344, 4
        %s346 = smul.addr %s345, 4
        %s347 = scalar_lea.vmem %s6, %s346
        %p348 = pneg %p194
        %p349 = pneg %p191
        %p350 = scmp.lt.s32.totalorder %s25, 1
        %s351 = scalar_select %p350, %s25, 1
        %s352 = smul.addr %s351, 16
        %s353 = smul.addr %s352, 4
        %s354 = scalar_lea.vmem %s7, %s353
        %p355 = pneg %p220
        %p356 = pneg %p217
        %p357 = pneg %p246
        %p358 = pneg %p243
        %s359 = smul.u32 2, %s24
        %p360 = scmp.lt.s32.totalorder %s359, 1
        %s361 = scalar_select %p360, %s359, 1
        %s362 = smul.addr %s361, 8
        %s363 = scalar_lea.vmem %s0, %s362
        %s364 = smul.u32 2, %s24
        %p365 = scmp.lt.s32.totalorder %s25, 1
        %s366 = scalar_select %p365, %s25, 1
        %s367 = smul.addr %s366, 8
        %s368 = scalar_lea.vmem %s4, %s367
        %p369 = scmp.lt.s32.totalorder %s25, 1
        %s370 = scalar_select %p369, %s25, 1
        %s371 = scalar_lea.vmem %s5, %s370
        %p372 = scmp.lt.s32.totalorder %s25, 1
        %s373 = scalar_select %p372, %s25, 1
        %s374 = smul.addr %s373, 4
        %s375 = smul.addr %s374, 4
        %s376 = scalar_lea.vmem %s6, %s375
        %p377 = scmp.lt.s32.totalorder %s25, 1
        %s378 = scalar_select %p377, %s25, 1
        %s379 = smul.addr %s378, 16
        %s380 = smul.addr %s379, 4
        %s381 = scalar_lea.vmem %s7, %s380
        %s382 = smul.u32 2, %s24
        %p384 = scmp.eq.s32.totalorder %s25, 0
        // Predicated region
        $region53: #{tpu_custom_call.1} parent=51 // pred_check
          %p385 = pneg %p384
        $region54: #{tpu_custom_call.1} parent=51 // pred_check_branch
          %387 = sbr.rel (%p385) target = $region56
        $region55: #{tpu_custom_call.1} parent=51 // pred_region
          %v388 = vld [vmem:[%s363] sm:$0xff]
          %v389 = vld [vmem:[%s363 + $0x8] sm:$0xff]
          %vm390 = vcmask 261120
          %391 = vst.msk [vmem:[#allocation2] sm:$0xff] %vm390, %v388
          %392 = vst.msk [vmem:[#allocation2 + $0x8] sm:$0xff] %vm390, %v389
        $region56: #{tpu_custom_call.1} parent=51 // pred_fallthru
          _
        %v393 = vld [vmem:[%s368] sm:$0x1f]
        %v394 = vld [vmem:[%s371] sm:$0x1]
        %v395 = vld [vmem:[%s376] sm:$0xf]
        %v396 = vld [vmem:[%s376 + $0x4] sm:$0xf]
        %v397 = vld [vmem:[%s376 + $0x8] sm:$0xf]
        %v398 = vld [vmem:[%s376 + $0xc] sm:$0xf]
        %v399 = vld [vmem:[%s381] sm:$0xf]
        %v400 = vld [vmem:[%s381 + $0x4] sm:$0xf]
        %v401 = vld [vmem:[%s381 + $0x8] sm:$0xf]
        %v402 = vld [vmem:[%s381 + $0xc] sm:$0xf]
        %v403 = vld [vmem:[%s381 + $0x10] sm:$0xf]
        %v404 = vld [vmem:[%s381 + $0x14] sm:$0xf]
        %v405 = vld [vmem:[%s381 + $0x18] sm:$0xf]
        %v406 = vld [vmem:[%s381 + $0x1c] sm:$0xf]
        %v407 = vld [vmem:[%s381 + $0x20] sm:$0xf]
        %v408 = vld [vmem:[%s381 + $0x24] sm:$0xf]
        %v409 = vld [vmem:[%s381 + $0x28] sm:$0xf]
        %v410 = vld [vmem:[%s381 + $0x2c] sm:$0xf]
        %v411 = vld [vmem:[%s381 + $0x30] sm:$0xf]
        %v412 = vld [vmem:[%s381 + $0x34] sm:$0xf]
        %v413 = vld [vmem:[%s381 + $0x38] sm:$0xf]
        %v414 = vld [vmem:[%s381 + $0x3c] sm:$0xf]
        %v415 = vld [vmem:[%s1] sm:$0xf]
        %v416 = vld [vmem:[%s2] sm:$0xf]
        %v417 = vld [vmem:[%s3] sm:$0xf]
        %v418 = vld [vmem:[%s3 + $0x4] sm:$0xf]
        %v419 = vld [vmem:[%s3 + $0x8] sm:$0xf]
        %v420 = vld [vmem:[%s3 + $0xc] sm:$0xf]
        %v421 = vld [vmem:[#allocation2] sm:$0xff]
        %v422 = vpack.c.bf16 %v421, %v421
        %v427 = vunpack.c.l.b16 %v417
        %v428 = vunpack.c.l.b16 %v418
        %v429 = vunpack.c.l.b16 %v419
        %v430 = vunpack.c.l.b16 %v420
        %v431 = vpack.c.b16 %v428, %v427
        %v432 = vpack.c.b16 %v430, %v429
        %vm435 = vcmask 261120
        %v437 = vsel %vm435, %v422, 0
        %439 = vmatprep.subr.bf16.mxu0 0
        %440 = vmatpush1.bf16.msra.mxu0 %v431
        %441 = vmatprep.subr.bf16.mxu0 0
        %442 = vmatpush1.bf16.msra.mxu0 %v432
        %443 = vmatprep.subr.bf16.mxu0 0
        %444 = vmatpush1.bf16.msra.mxu0 0
        %445 = vmatprep.subr.bf16.mxu0 0
        %446 = vmatpush1.bf16.msra.mxu0 0
        %447 = vmatprep.subr.bf16.mxu0 0
        %448 = vmatpush1.bf16.msra.mxu0 0
        %449 = vmatprep.subr.bf16.mxu0 0
        %450 = vmatpush1.bf16.msra.mxu0 0
        %451 = vmatprep.subr.bf16.mxu0 0
        %452 = vmatpush1.bf16.msra.mxu0 0
        %453 = vmatprep.subr.bf16.mxu0 0
        %454 = vmatpush1.bf16.msra.mxu0 0
        %455 = vmatprep.subr.bf16.mxu0 0
        %456 = vmatpush1.bf16.msra.mxu0 0
        %457 = vmatprep.subr.bf16.mxu0 0
        %458 = vmatpush1.bf16.msra.mxu0 0
        %459 = vmatprep.subr.bf16.mxu0 0
        %460 = vmatpush1.bf16.msra.mxu0 0
        %461 = vmatprep.subr.bf16.mxu0 0
        %462 = vmatpush1.bf16.msra.mxu0 0
        %463 = vmatprep.subr.bf16.mxu0 0
        %464 = vmatpush1.bf16.msra.mxu0 0
        %465 = vmatprep.subr.bf16.mxu0 0
        %466 = vmatpush1.bf16.msra.mxu0 0
        %467 = vmatprep.subr.bf16.mxu0 0
        %468 = vmatpush1.bf16.msra.mxu0 0
        %469 = vmatprep.subr.bf16.mxu0 0
        %470 = vmatpush1.bf16.msra.mxu0 0
        %471 = vmatprep.mubr.bf16.mxu0 0
        %472 = vmatmul.mubr.bf16.gmra.mrb[0].mxu0 %v437
        %v473 = vpop.f32.mrb[0].mxu0
        %v474 = vadd.f32 0.0, %v473
        %v475 = vpop.f32.mrb[0].mxu0
        %v476 = vpop.f32.mrb[0].mxu0
        %v477 = vpop.f32.mrb[0].mxu0
        %478 = vdwg.mxu0
        %v479 = vpack.c.bf16 %v474, %v474
        %481 = vrot.lane.b32.xlu0 %v479, 96
        %v482 = vpop.permute.xlu0 %481
        %vm483 = vcmask 64512
        %v485 = vsel %vm483, %v416, 0
        %vm487 = vcmask 1043456
        %v489 = vsel %vm487, %v482, 0
        %491 = vmatprep.subr.bf16.mxu0 0
        %492 = vmatpush1.bf16.msra.mxu0 %v489
        %493 = vmatprep.subr.bf16.mxu0 0
        %494 = vmatpush1.bf16.msra.mxu0 0
        %495 = vmatprep.subr.bf16.mxu0 0
        %496 = vmatpush1.bf16.msra.mxu0 0
        %497 = vmatprep.subr.bf16.mxu0 0
        %498 = vmatpush1.bf16.msra.mxu0 0
        %499 = vmatprep.subr.bf16.mxu0 0
        %500 = vmatpush1.bf16.msra.mxu0 0
        %501 = vmatprep.subr.bf16.mxu0 0
        %502 = vmatpush1.bf16.msra.mxu0 0
        %503 = vmatprep.subr.bf16.mxu0 0
        %504 = vmatpush1.bf16.msra.mxu0 0
        %505 = vmatprep.subr.bf16.mxu0 0
        %506 = vmatpush1.bf16.msra.mxu0 0
        %507 = vmatprep.subr.bf16.mxu0 0
        %508 = vmatpush1.bf16.msra.mxu0 0
        %509 = vmatprep.subr.bf16.mxu0 0
        %510 = vmatpush1.bf16.msra.mxu0 0
        %511 = vmatprep.subr.bf16.mxu0 0
        %512 = vmatpush1.bf16.msra.mxu0 0
        %513 = vmatprep.subr.bf16.mxu0 0
        %514 = vmatpush1.bf16.msra.mxu0 0
        %515 = vmatprep.subr.bf16.mxu0 0
        %516 = vmatpush1.bf16.msra.mxu0 0
        %517 = vmatprep.subr.bf16.mxu0 0
        %518 = vmatpush1.bf16.msra.mxu0 0
        %519 = vmatprep.subr.bf16.mxu0 0
        %520 = vmatpush1.bf16.msra.mxu0 0
        %521 = vmatprep.subr.bf16.mxu0 0
        %522 = vmatpush1.bf16.msra.mxu0 0
        %523 = vmatprep.mubr.bf16.mxu0 0
        %524 = vmatmul.mubr.bf16.gmra.mrb[0].mxu0 %v485
        %v525 = vpop.f32.mrb[0].mxu0
        %v526 = vadd.f32 0.0, %v525
        %v527 = vpop.f32.mrb[0].mxu0
        %v528 = vpop.f32.mrb[0].mxu0
        %v529 = vpop.f32.mrb[0].mxu0
        %530 = vdwg.mxu0
        %v532 = vsel %vm483, %v415, 0
        %v535 = vsel %vm487, %v479, 0
        %537 = vmatprep.subr.bf16.mxu0 0
        %538 = vmatpush1.bf16.msra.mxu0 %v535
        %539 = vmatprep.subr.bf16.mxu0 0
        %540 = vmatpush1.bf16.msra.mxu0 0
        %541 = vmatprep.subr.bf16.mxu0 0
        %542 = vmatpush1.bf16.msra.mxu0 0
        %543 = vmatprep.subr.bf16.mxu0 0
        %544 = vmatpush1.bf16.msra.mxu0 0
        %545 = vmatprep.subr.bf16.mxu0 0
        %546 = vmatpush1.bf16.msra.mxu0 0
        %547 = vmatprep.subr.bf16.mxu0 0
        %548 = vmatpush1.bf16.msra.mxu0 0
        %549 = vmatprep.subr.bf16.mxu0 0
        %550 = vmatpush1.bf16.msra.mxu0 0
        %551 = vmatprep.subr.bf16.mxu0 0
        %552 = vmatpush1.bf16.msra.mxu0 0
        %553 = vmatprep.subr.bf16.mxu0 0
        %554 = vmatpush1.bf16.msra.mxu0 0
        %555 = vmatprep.subr.bf16.mxu0 0
        %556 = vmatpush1.bf16.msra.mxu0 0
        %557 = vmatprep.subr.bf16.mxu0 0
        %558 = vmatpush1.bf16.msra.mxu0 0
        %559 = vmatprep.subr.bf16.mxu0 0
        %560 = vmatpush1.bf16.msra.mxu0 0
        %561 = vmatprep.subr.bf16.mxu0 0
        %562 = vmatpush1.bf16.msra.mxu0 0
        %563 = vmatprep.subr.bf16.mxu0 0
        %564 = vmatpush1.bf16.msra.mxu0 0
        %565 = vmatprep.subr.bf16.mxu0 0
        %566 = vmatpush1.bf16.msra.mxu0 0
        %567 = vmatprep.subr.bf16.mxu0 0
        %568 = vmatpush1.bf16.msra.mxu0 0
        %569 = vmatprep.mubr.bf16.mxu0 0
        %570 = vmatmul.mubr.bf16.gmra.mrb[0].mxu0 %v532
        %v571 = vpop.f32.mrb[0].mxu0
        %v572 = vadd.f32 %v526, %v571
        %v573 = vpop.f32.mrb[0].mxu0
        %v574 = vpop.f32.mrb[0].mxu0
        %v575 = vpop.f32.mrb[0].mxu0
        %576 = vdwg.mxu0
        %v577 = vadd.f32 %v421, %v572
        %v578 = vsel %vm435, %v577, 0.0
        %579 = vadd.xlane.f32.xlu0 %v578
        %v580 = vpop.xlane.xlu0 %579
        %v581 = vrcp.pop 32.0
        %v582 = vmul.f32 %v580, %v581
        %v583 = vsub.f32 %v577, %v582
        %v584 = vmul.f32 %v583, %v583
        %v585 = vsel %vm435, %v584, 0.0
        %586 = vadd.xlane.f32.xlu0 %v585
        %v587 = vpop.xlane.xlu0 %586
        %v588 = vmul.f32 %v587, %v581
        %v589 = vadd.f32 %v588, 1e-12
        %v590 = vrsqrt.pop %v589
        %v591 = vmul.f32 %v583, %v590
        %v592 = vlaneseq
        %v593 = vshrl.u32 %v592, 7
        %v594 = vsub.s32 0, %v593
        %v595 = vrot.slane %v393, %v594
        %v596 = vmul.f32 %v591, %v595
        %v597 = vlaneseq
        %v598 = vshrl.u32 %v597, 7
        %v599 = vsub.s32 1, %v598
        %v600 = vrot.slane %v393, %v599
        %v601 = vadd.f32 %v596, %v600
        %v602 = vpack.c.bf16 %v601, %v601
        %v604 = vlaneseq
        %v605 = vshrl.u32 %v604, 7
        %v606 = vsub.s32 0, %v605
        %v607 = vrot.slane %v394, %v606
        %v613 = vunpack.c.l.b16 %v395
        %v614 = vunpack.c.l.b16 %v396
        %v615 = vunpack.c.l.b16 %v397
        %v616 = vunpack.c.l.b16 %v398
        %v617 = vpack.c.b16 %v614, %v613
        %v618 = vpack.c.b16 %v616, %v615
        %v622 = vsel %vm435, %v602, 0
        %624 = vmatprep.subr.bf16.mxu0 0
        %625 = vmatpush1.bf16.msra.mxu0 %v617
        %626 = vmatprep.subr.bf16.mxu0 0
        %627 = vmatpush1.bf16.msra.mxu0 %v618
        %628 = vmatprep.subr.bf16.mxu0 0
        %629 = vmatpush1.bf16.msra.mxu0 0
        %630 = vmatprep.subr.bf16.mxu0 0
        %631 = vmatpush1.bf16.msra.mxu0 0
        %632 = vmatprep.subr.bf16.mxu0 0
        %633 = vmatpush1.bf16.msra.mxu0 0
        %634 = vmatprep.subr.bf16.mxu0 0
        %635 = vmatpush1.bf16.msra.mxu0 0
        %636 = vmatprep.subr.bf16.mxu0 0
        %637 = vmatpush1.bf16.msra.mxu0 0
        %638 = vmatprep.subr.bf16.mxu0 0
        %639 = vmatpush1.bf16.msra.mxu0 0
        %640 = vmatprep.subr.bf16.mxu0 0
        %641 = vmatpush1.bf16.msra.mxu0 0
        %642 = vmatprep.subr.bf16.mxu0 0
        %643 = vmatpush1.bf16.msra.mxu0 0
        %644 = vmatprep.subr.bf16.mxu0 0
        %645 = vmatpush1.bf16.msra.mxu0 0
        %646 = vmatprep.subr.bf16.mxu0 0
        %647 = vmatpush1.bf16.msra.mxu0 0
        %648 = vmatprep.subr.bf16.mxu0 0
        %649 = vmatpush1.bf16.msra.mxu0 0
        %650 = vmatprep.subr.bf16.mxu0 0
        %651 = vmatpush1.bf16.msra.mxu0 0
        %652 = vmatprep.subr.bf16.mxu0 0
        %653 = vmatpush1.bf16.msra.mxu0 0
        %654 = vmatprep.subr.bf16.mxu0 0
        %655 = vmatpush1.bf16.msra.mxu0 0
        %656 = vmatprep.mubr.bf16.mxu0 0
        %657 = vmatmul.mubr.bf16.gmra.mrb[0].mxu0 %v622
        %v658 = vpop.f32.mrb[0].mxu0
        %v659 = vadd.f32 %v607, %v658
        %v660 = vpop.f32.mrb[0].mxu0
        %v661 = vpop.f32.mrb[0].mxu0
        %v662 = vpop.f32.mrb[0].mxu0
        %663 = vdwg.mxu0
        %v664 = vmul.f32 %v659, 0.5
        %v665 = vmul.f32 %v659, 0.044715
        %v666 = vmul.f32 %v665, %v659
        %v667 = vmul.f32 %v666, %v659
        %v668 = vadd.f32 %v659, %v667
        %v669 = vmul.f32 %v668, 0.7978846
        %v670 = vtanh.pop %v669
        %v671 = vadd.f32 %v670, 1.0
        %v672 = vmul.f32 %v664, %v671
        %v673 = vpack.c.bf16 %v672, %v672
        %v674 = vlaneseq
        %v675 = vshrl.u32 %v674, 7
        %v676 = vsub.s32 4, %v675
        %v677 = vrot.slane %v393, %v676
        %v694 = vunpack.c.l.b16 %v399
        %v695 = vunpack.c.l.b16 %v400
        %v696 = vunpack.c.l.b16 %v401
        %v697 = vunpack.c.l.b16 %v402
        %v698 = vunpack.c.l.b16 %v403
        %v699 = vunpack.c.l.b16 %v404
        %v700 = vunpack.c.l.b16 %v405
        %v701 = vunpack.c.l.b16 %v406
        %v702 = vunpack.c.l.b16 %v407
        %v703 = vunpack.c.l.b16 %v408
        %v704 = vunpack.c.l.b16 %v409
        %v705 = vunpack.c.l.b16 %v410
        %v706 = vunpack.c.l.b16 %v411
        %v707 = vunpack.c.l.b16 %v412
        %v708 = vunpack.c.l.b16 %v413
        %v709 = vunpack.c.l.b16 %v414
        %v710 = vpack.c.b16 %v695, %v694
        %v711 = vpack.c.b16 %v697, %v696
        %v712 = vpack.c.b16 %v699, %v698
        %v713 = vpack.c.b16 %v701, %v700
        %v714 = vpack.c.b16 %v703, %v702
        %v715 = vpack.c.b16 %v705, %v704
        %v716 = vpack.c.b16 %v707, %v706
        %v717 = vpack.c.b16 %v709, %v708
        %726 = vmatprep.subr.bf16.mxu0 0
        %727 = vmatpush1.bf16.msra.mxu0 %v710
        %728 = vmatprep.subr.bf16.mxu0 0
        %729 = vmatpush1.bf16.msra.mxu0 %v711
        %730 = vmatprep.subr.bf16.mxu0 0
        %731 = vmatpush1.bf16.msra.mxu0 %v712
        %732 = vmatprep.subr.bf16.mxu0 0
        %733 = vmatpush1.bf16.msra.mxu0 %v713
        %734 = vmatprep.subr.bf16.mxu0 0
        %735 = vmatpush1.bf16.msra.mxu0 %v714
        %736 = vmatprep.subr.bf16.mxu0 0
        %737 = vmatpush1.bf16.msra.mxu0 %v715
        %738 = vmatprep.subr.bf16.mxu0 0
        %739 = vmatpush1.bf16.msra.mxu0 %v716
        %740 = vmatprep.subr.bf16.mxu0 0
        %741 = vmatpush1.bf16.msra.mxu0 %v717
        %742 = vmatprep.subr.bf16.mxu0 0
        %743 = vmatpush1.bf16.msra.mxu0 0
        %744 = vmatprep.subr.bf16.mxu0 0
        %745 = vmatpush1.bf16.msra.mxu0 0
        %746 = vmatprep.subr.bf16.mxu0 0
        %747 = vmatpush1.bf16.msra.mxu0 0
        %748 = vmatprep.subr.bf16.mxu0 0
        %749 = vmatpush1.bf16.msra.mxu0 0
        %750 = vmatprep.subr.bf16.mxu0 0
        %751 = vmatpush1.bf16.msra.mxu0 0
        %752 = vmatprep.subr.bf16.mxu0 0
        %753 = vmatpush1.bf16.msra.mxu0 0
        %754 = vmatprep.subr.bf16.mxu0 0
        %755 = vmatpush1.bf16.msra.mxu0 0
        %756 = vmatprep.subr.bf16.mxu0 0
        %757 = vmatpush1.bf16.msra.mxu0 0
        %758 = vmatprep.mubr.bf16.mxu0 0
        %759 = vmatmul.mubr.bf16.gmra.mrb[0].mxu0 %v673
        %v760 = vpop.f32.mrb[0].mxu0
        %v761 = vadd.f32 %v677, %v760
        %v762 = vpop.f32.mrb[0].mxu0
        %v763 = vpop.f32.mrb[0].mxu0
        %v764 = vpop.f32.mrb[0].mxu0
        %765 = vdwg.mxu0
        %v766 = vadd.f32 %v761, %v601
        %v767 = vsel %vm435, %v766, 0.0
        %768 = vadd.xlane.f32.xlu0 %v767
        %v769 = vpop.xlane.xlu0 %768
        %v770 = vmul.f32 %v769, %v581
        %v771 = vsub.f32 %v766, %v770
        %v772 = vmul.f32 %v771, %v771
        %v773 = vsel %vm435, %v772, 0.0
        %774 = vadd.xlane.f32.xlu0 %v773
        %v775 = vpop.xlane.xlu0 %774
        %v776 = vmul.f32 %v775, %v581
        %v777 = vadd.f32 %v776, 1e-12
        %v778 = vrsqrt.pop %v777
        %v779 = vmul.f32 %v771, %v778
        %v780 = vlaneseq
        %v781 = vshrl.u32 %v780, 7
        %v782 = vsub.s32 2, %v781
        %v783 = vrot.slane %v393, %v782
        %v784 = vmul.f32 %v779, %v783
        %v785 = vlaneseq
        %v786 = vshrl.u32 %v785, 7
        %v787 = vsub.s32 3, %v786
        %v788 = vrot.slane %v393, %v787
        %v789 = vadd.f32 %v784, %v788
        %790 = vst.msk [vmem:[#allocation2] sm:$0xff] %vm435, %v789
        %s791 = scalar_lea.vmem [#allocation2], 8
        %v792 = vld [vmem:[%s791] sm:$0xff]
        %v793 = vpack.c.bf16 %v792, %v792
        %v795 = vsel %vm435, %v793, 0
        %797 = vmatprep.subr.bf16.mxu0 0
        %798 = vmatpush1.bf16.msra.mxu0 %v431
        %799 = vmatprep.subr.bf16.mxu0 0
        %800 = vmatpush1.bf16.msra.mxu0 %v432
        %801 = vmatprep.subr.bf16.mxu0 0
        %802 = vmatpush1.bf16.msra.mxu0 0
        %803 = vmatprep.subr.bf16.mxu0 0
        %804 = vmatpush1.bf16.msra.mxu0 0
        %805 = vmatprep.subr.bf16.mxu0 0
        %806 = vmatpush1.bf16.msra.mxu0 0
        %807 = vmatprep.subr.bf16.mxu0 0
        %808 = vmatpush1.bf16.msra.mxu0 0
        %809 = vmatprep.subr.bf16.mxu0 0
        %810 = vmatpush1.bf16.msra.mxu0 0
        %811 = vmatprep.subr.bf16.mxu0 0
        %812 = vmatpush1.bf16.msra.mxu0 0
        %813 = vmatprep.subr.bf16.mxu0 0
        %814 = vmatpush1.bf16.msra.mxu0 0
        %815 = vmatprep.subr.bf16.mxu0 0
        %816 = vmatpush1.bf16.msra.mxu0 0
        %817 = vmatprep.subr.bf16.mxu0 0
        %818 = vmatpush1.bf16.msra.mxu0 0
        %819 = vmatprep.subr.bf16.mxu0 0
        %820 = vmatpush1.bf16.msra.mxu0 0
        %821 = vmatprep.subr.bf16.mxu0 0
        %822 = vmatpush1.bf16.msra.mxu0 0
        %823 = vmatprep.subr.bf16.mxu0 0
        %824 = vmatpush1.bf16.msra.mxu0 0
        %825 = vmatprep.subr.bf16.mxu0 0
        %826 = vmatpush1.bf16.msra.mxu0 0
        %827 = vmatprep.subr.bf16.mxu0 0
        %828 = vmatpush1.bf16.msra.mxu0 0
        %829 = vmatprep.mubr.bf16.mxu0 0
        %830 = vmatmul.mubr.bf16.gmra.mrb[0].mxu0 %v795
        %v831 = vpop.f32.mrb[0].mxu0
        %v832 = vadd.f32 0.0, %v831
        %v833 = vpop.f32.mrb[0].mxu0
        %v834 = vpop.f32.mrb[0].mxu0
        %v835 = vpop.f32.mrb[0].mxu0
        %836 = vdwg.mxu0
        %v837 = vpack.c.bf16 %v832, %v832
        %839 = vrot.lane.b32.xlu0 %v837, 96
        %v840 = vpop.permute.xlu0 %839
        %v842 = vsel %vm487, %v840, 0
        %844 = vmatprep.subr.bf16.mxu0 0
        %845 = vmatpush1.bf16.msra.mxu0 %v842
        %846 = vmatprep.subr.bf16.mxu0 0
        %847 = vmatpush1.bf16.msra.mxu0 0
        %848 = vmatprep.subr.bf16.mxu0 0
        %849 = vmatpush1.bf16.msra.mxu0 0
        %850 = vmatprep.subr.bf16.mxu0 0
        %851 = vmatpush1.bf16.msra.mxu0 0
        %852 = vmatprep.subr.bf16.mxu0 0
        %853 = vmatpush1.bf16.msra.mxu0 0
        %854 = vmatprep.subr.bf16.mxu0 0
        %855 = vmatpush1.bf16.msra.mxu0 0
        %856 = vmatprep.subr.bf16.mxu0 0
        %857 = vmatpush1.bf16.msra.mxu0 0
        %858 = vmatprep.subr.bf16.mxu0 0
        %859 = vmatpush1.bf16.msra.mxu0 0
        %860 = vmatprep.subr.bf16.mxu0 0
        %861 = vmatpush1.bf16.msra.mxu0 0
        %862 = vmatprep.subr.bf16.mxu0 0
        %863 = vmatpush1.bf16.msra.mxu0 0
        %864 = vmatprep.subr.bf16.mxu0 0
        %865 = vmatpush1.bf16.msra.mxu0 0
        %866 = vmatprep.subr.bf16.mxu0 0
        %867 = vmatpush1.bf16.msra.mxu0 0
        %868 = vmatprep.subr.bf16.mxu0 0
        %869 = vmatpush1.bf16.msra.mxu0 0
        %870 = vmatprep.subr.bf16.mxu0 0
        %871 = vmatpush1.bf16.msra.mxu0 0
        %872 = vmatprep.subr.bf16.mxu0 0
        %873 = vmatpush1.bf16.msra.mxu0 0
        %874 = vmatprep.subr.bf16.mxu0 0
        %875 = vmatpush1.bf16.msra.mxu0 0
        %876 = vmatprep.mubr.bf16.mxu0 0
        %877 = vmatmul.mubr.bf16.gmra.mrb[0].mxu0 %v485
        %v878 = vpop.f32.mrb[0].mxu0
        %v879 = vadd.f32 0.0, %v878
        %v880 = vpop.f32.mrb[0].mxu0
        %v881 = vpop.f32.mrb[0].mxu0
        %v882 = vpop.f32.mrb[0].mxu0
        %883 = vdwg.mxu0
        %v885 = vsel %vm487, %v837, 0
        %887 = vmatprep.subr.bf16.mxu0 0
        %888 = vmatpush1.bf16.msra.mxu0 %v885
        %889 = vmatprep.subr.bf16.mxu0 0
        %890 = vmatpush1.bf16.msra.mxu0 0
        %891 = vmatprep.subr.bf16.mxu0 0
        %892 = vmatpush1.bf16.msra.mxu0 0
        %893 = vmatprep.subr.bf16.mxu0 0
        %894 = vmatpush1.bf16.msra.mxu0 0
        %895 = vmatprep.subr.bf16.mxu0 0
        %896 = vmatpush1.bf16.msra.mxu0 0
        %897 = vmatprep.subr.bf16.mxu0 0
        %898 = vmatpush1.bf16.msra.mxu0 0
        %899 = vmatprep.subr.bf16.mxu0 0
        %900 = vmatpush1.bf16.msra.mxu0 0
        %901 = vmatprep.subr.bf16.mxu0 0
        %902 = vmatpush1.bf16.msra.mxu0 0
        %903 = vmatprep.subr.bf16.mxu0 0
        %904 = vmatpush1.bf16.msra.mxu0 0
        %905 = vmatprep.subr.bf16.mxu0 0
        %906 = vmatpush1.bf16.msra.mxu0 0
        %907 = vmatprep.subr.bf16.mxu0 0
        %908 = vmatpush1.bf16.msra.mxu0 0
        %909 = vmatprep.subr.bf16.mxu0 0
        %910 = vmatpush1.bf16.msra.mxu0 0
        %911 = vmatprep.subr.bf16.mxu0 0
        %912 = vmatpush1.bf16.msra.mxu0 0
        %913 = vmatprep.subr.bf16.mxu0 0
        %914 = vmatpush1.bf16.msra.mxu0 0
        %915 = vmatprep.subr.bf16.mxu0 0
        %916 = vmatpush1.bf16.msra.mxu0 0
        %917 = vmatprep.subr.bf16.mxu0 0
        %918 = vmatpush1.bf16.msra.mxu0 0
        %919 = vmatprep.mubr.bf16.mxu0 0
        %920 = vmatmul.mubr.bf16.gmra.mrb[0].mxu0 %v532
        %v921 = vpop.f32.mrb[0].mxu0
        %v922 = vadd.f32 %v879, %v921
        %v923 = vpop.f32.mrb[0].mxu0
        %v924 = vpop.f32.mrb[0].mxu0
        %v925 = vpop.f32.mrb[0].mxu0
        %926 = vdwg.mxu0
        %v927 = vadd.f32 %v792, %v922
        %v928 = vsel %vm435, %v927, 0.0
        %929 = vadd.xlane.f32.xlu0 %v928
        %v930 = vpop.xlane.xlu0 %929
        %v931 = vmul.f32 %v930, %v581
        %v932 = vsub.f32 %v927, %v931
        %v933 = vmul.f32 %v932, %v932
        %v934 = vsel %vm435, %v933, 0.0
        %935 = vadd.xlane.f32.xlu0 %v934
        %v936 = vpop.xlane.xlu0 %935
        %v937 = vmul.f32 %v936, %v581
        %v938 = vadd.f32 %v937, 1e-12
        %v939 = vrsqrt.pop %v938
        %v940 = vmul.f32 %v932, %v939
        %v941 = vmul.f32 %v940, %v595
        %v942 = vadd.f32 %v941, %v600
        %v943 = vpack.c.bf16 %v942, %v942
        %v945 = vsel %vm435, %v943, 0
        %947 = vmatprep.subr.bf16.mxu0 0
        %948 = vmatpush1.bf16.msra.mxu0 %v617
        %949 = vmatprep.subr.bf16.mxu0 0
        %950 = vmatpush1.bf16.msra.mxu0 %v618
        %951 = vmatprep.subr.bf16.mxu0 0
        %952 = vmatpush1.bf16.msra.mxu0 0
        %953 = vmatprep.subr.bf16.mxu0 0
        %954 = vmatpush1.bf16.msra.mxu0 0
        %955 = vmatprep.subr.bf16.mxu0 0
        %956 = vmatpush1.bf16.msra.mxu0 0
        %957 = vmatprep.subr.bf16.mxu0 0
        %958 = vmatpush1.bf16.msra.mxu0 0
        %959 = vmatprep.subr.bf16.mxu0 0
        %960 = vmatpush1.bf16.msra.mxu0 0
        %961 = vmatprep.subr.bf16.mxu0 0
        %962 = vmatpush1.bf16.msra.mxu0 0
        %963 = vmatprep.subr.bf16.mxu0 0
        %964 = vmatpush1.bf16.msra.mxu0 0
        %965 = vmatprep.subr.bf16.mxu0 0
        %966 = vmatpush1.bf16.msra.mxu0 0
        %967 = vmatprep.subr.bf16.mxu0 0
        %968 = vmatpush1.bf16.msra.mxu0 0
        %969 = vmatprep.subr.bf16.mxu0 0
        %970 = vmatpush1.bf16.msra.mxu0 0
        %971 = vmatprep.subr.bf16.mxu0 0
        %972 = vmatpush1.bf16.msra.mxu0 0
        %973 = vmatprep.subr.bf16.mxu0 0
        %974 = vmatpush1.bf16.msra.mxu0 0
        %975 = vmatprep.subr.bf16.mxu0 0
        %976 = vmatpush1.bf16.msra.mxu0 0
        %977 = vmatprep.subr.bf16.mxu0 0
        %978 = vmatpush1.bf16.msra.mxu0 0
        %979 = vmatprep.mubr.bf16.mxu0 0
        %980 = vmatmul.mubr.bf16.gmra.mrb[0].mxu0 %v945
        %v981 = vpop.f32.mrb[0].mxu0
        %v982 = vadd.f32 %v607, %v981
        %v983 = vpop.f32.mrb[0].mxu0
        %v984 = vpop.f32.mrb[0].mxu0
        %v985 = vpop.f32.mrb[0].mxu0
        %986 = vdwg.mxu0
        %v987 = vmul.f32 %v982, 0.5
        %v988 = vmul.f32 %v982, 0.044715
        %v989 = vmul.f32 %v988, %v982
        %v990 = vmul.f32 %v989, %v982
        %v991 = vadd.f32 %v982, %v990
        %v992 = vmul.f32 %v991, 0.7978846
        %v993 = vtanh.pop %v992
        %v994 = vadd.f32 %v993, 1.0
        %v995 = vmul.f32 %v987, %v994
        %v996 = vpack.c.bf16 %v995, %v995
        %997 = vmatprep.subr.bf16.mxu0 0
        %998 = vmatpush1.bf16.msra.mxu0 %v710
        %999 = vmatprep.subr.bf16.mxu0 0
        %1000 = vmatpush1.bf16.msra.mxu0 %v711
        %1001 = vmatprep.subr.bf16.mxu0 0
        %1002 = vmatpush1.bf16.msra.mxu0 %v712
        %1003 = vmatprep.subr.bf16.mxu0 0
        %1004 = vmatpush1.bf16.msra.mxu0 %v713
        %1005 = vmatprep.subr.bf16.mxu0 0
        %1006 = vmatpush1.bf16.msra.mxu0 %v714
        %1007 = vmatprep.subr.bf16.mxu0 0
        %1008 = vmatpush1.bf16.msra.mxu0 %v715
        %1009 = vmatprep.subr.bf16.mxu0 0
        %1010 = vmatpush1.bf16.msra.mxu0 %v716
        %1011 = vmatprep.subr.bf16.mxu0 0
        %1012 = vmatpush1.bf16.msra.mxu0 %v717
        %1013 = vmatprep.subr.bf16.mxu0 0
        %1014 = vmatpush1.bf16.msra.mxu0 0
        %1015 = vmatprep.subr.bf16.mxu0 0
        %1016 = vmatpush1.bf16.msra.mxu0 0
        %1017 = vmatprep.subr.bf16.mxu0 0
        %1018 = vmatpush1.bf16.msra.mxu0 0
        %1019 = vmatprep.subr.bf16.mxu0 0
        %1020 = vmatpush1.bf16.msra.mxu0 0
        %1021 = vmatprep.subr.bf16.mxu0 0
        %1022 = vmatpush1.bf16.msra.mxu0 0
        %1023 = vmatprep.subr.bf16.mxu0 0
        %1024 = vmatpush1.bf16.msra.mxu0 0
        %1025 = vmatprep.subr.bf16.mxu0 0
        %1026 = vmatpush1.bf16.msra.mxu0 0
        %1027 = vmatprep.subr.bf16.mxu0 0
        %1028 = vmatpush1.bf16.msra.mxu0 0
        %1029 = vmatprep.mubr.bf16.mxu0 0
        %1030 = vmatmul.mubr.bf16.gmra.mrb[0].mxu0 %v996
        %v1031 = vpop.f32.mrb[0].mxu0
        %v1032 = vadd.f32 %v677, %v1031
        %v1033 = vpop.f32.mrb[0].mxu0
        %v1034 = vpop.f32.mrb[0].mxu0
        %v1035 = vpop.f32.mrb[0].mxu0
        %1036 = vdwg.mxu0
        %v1037 = vadd.f32 %v1032, %v942
        %v1038 = vsel %vm435, %v1037, 0.0
        %1039 = vadd.xlane.f32.xlu0 %v1038
        %v1040 = vpop.xlane.xlu0 %1039
        %v1041 = vmul.f32 %v1040, %v581
        %v1042 = vsub.f32 %v1037, %v1041
        %v1043 = vmul.f32 %v1042, %v1042
        %v1044 = vsel %vm435, %v1043, 0.0
        %1045 = vadd.xlane.f32.xlu0 %v1044
        %v1046 = vpop.xlane.xlu0 %1045
        %v1047 = vmul.f32 %v1046, %v581
        %v1048 = vadd.f32 %v1047, 1e-12
        %v1049 = vrsqrt.pop %v1048
        %v1050 = vmul.f32 %v1042, %v1049
        %v1051 = vmul.f32 %v1050, %v783
        %v1052 = vadd.f32 %v1051, %v788
        %1053 = vst.msk [vmem:[%s791] sm:$0xff] %vm435, %v1052
        // Predicated region
        $region57: #{tpu_custom_call.1} parent=51 // pred_check
          %p1054 = pneg %p243
        $region58: #{tpu_custom_call.1} parent=51 // pred_check_branch
          %1056 = sbr.rel (%p1054) target = $region60
        $region59: #{tpu_custom_call.1} parent=51 // pred_region
          %s1057 = smul.u32 2, %s24
          %s1059 = ssub.s32 256, 256
          %1060 = vsyncadd [#allocation3], %s1059
          %s1061 = smul.addr %s1057, 128
          %s1062 = scalar_lea.hbm %s8, %s1061
          %s1063 = sshll.u32 [#allocation2], 4
          %s1064 = int_to_ptr.vmem [resolvable:$true] %s1063
          %1069 = dma.vmem_to_hbm [thread:$0]  %s1064, 256, %s1062, [#allocation3], 128, 128, 8
        $region60: #{tpu_custom_call.1} parent=51 // pred_fallthru
          _
        // Predicated region
        $region61: #{tpu_custom_call.1} parent=51 // pred_check
          %p1070 = pneg %p243
        $region62: #{tpu_custom_call.1} parent=51 // pred_check_branch
          %1072 = sbr.rel (%p1070) target = $region64
        $region63: #{tpu_custom_call.1} parent=51 // pred_region
          %1073 = dma.done [#allocation3], 256
        $region64: #{tpu_custom_call.1} parent=51 // pred_fallthru
          _
      $region52: #{tpu_custom_call.1} parent=5 // pred_fallthru
        _
      %p1074 = scmp.le.s32.totalorder 2, %s15
      // Predicated region
      $region65: #{tpu_custom_call.1} parent=5 // pred_check
        %p1075 = pneg %p1074
      $region66: #{tpu_custom_call.1} parent=5 // pred_check_branch
        %1077 = sbr.rel (%p1075) target = $region68
      $region67: #{tpu_custom_call.1} parent=5 // pred_region
        %s1078 = ssub.s32 %s15, 2
      $region68: #{tpu_custom_call.1} parent=5 // pred_fallthru
        _
    $region6: #{tpu_custom_call.1} parent=1 // loop_footer
      %s19 = sadd.s32 1, %s15
    $region7: #{tpu_custom_call.1} parent=1 // loop_footer_branch
      %14 = sbr.rel target = $region3
    $region8: #{tpu_custom_call.1} parent=1 // loop_exit
      _
    %1079 = vsyncpa [#allocation3], 1
    %s1080 = scalar_lea.sflag [#allocation3], 1
    %1081 = vsyncpa %s1080, 1

</llo_original>
